<compile_context>
chip_gen: v7x
topology: tpu7x:2x2x1
jax: 0.10.0
libtpu: 0.0.40
codegen_flags: <defaults>
</compile_context>

<pallas_src>
from functools import partial

import jax
import jax.numpy as jnp
from jax.experimental import pallas as pl
from jax.experimental.pallas import tpu as pltpu


# ---------------------------------------------------------------------------
# Fused SE-block kernel: Bn batch elements per grid step.
# ---------------------------------------------------------------------------
def _se_block_kernel(x_ref, w1_ref, b1_ref, w2_ref, b2_ref, o_ref, *, inv_hw):
    # x_ref : VMEM (Bn, C, HW)  channels on sublanes, spatial on lanes
    # w1_ref: VMEM (Ch, C)      fc1.weight (PyTorch layout, Ch = C // reduction)
    # b1_ref: VMEM (1, Ch)      fc1.bias
    # w2_ref: VMEM (C, Ch)      fc2.weight (PyTorch layout)
    # b2_ref: VMEM (1, C)       fc2.bias
    # o_ref : VMEM (Bn, C, HW)
    xf = x_ref[...].astype(jnp.float32)                 # f32 accumulation even for bf16 I/O

    # --- squeeze: global average pool over the spatial (lane) axis ---
    mean = jnp.sum(xf, axis=2) * inv_hw                 # (Bn, C)

    # --- excite: fc1 (C -> Ch) + ReLU  (VPU broadcast-mul + lane reduce) ---
    h = jnp.sum(mean[:, None, :] * w1_ref[...][None, :, :], axis=2)   # (Bn, Ch)
    h = jnp.maximum(h + b1_ref[...], 0.0)

    # --- fc2 (Ch -> C) + sigmoid ---
    g = jnp.sum(h[:, None, :] * w2_ref[...][None, :, :], axis=2)      # (Bn, C)
    g = g + b2_ref[...]
    g = 1.0 / (1.0 + jnp.exp(-g))                        # sigmoid on EUP

    # --- scale: broadcast per-channel gate across the spatial lanes ---
    o_ref[...] = (xf * g[:, :, None]).astype(o_ref.dtype)


# ---------------------------------------------------------------------------
# Wrapper
# ---------------------------------------------------------------------------
def se_block(x, params, *, donate_x=False, block_bytes_target=4 << 20):
    N, C, H, W = x.shape
    Ch = params["w1"].shape[0]
    HW = H * W
    itemsize = jnp.dtype(x.dtype).itemsize

    # Free reshape (contiguous NCHW); puts the large spatial axis on lanes.
    x3 = x.reshape(N, C, HW)

    # --- choose batch fold Bn: largest divisor of N with x block under the byte
    # target, while keeping >= min(N, 4) grid steps (v7x: 2 TCs x >=2 steps). ---
    slab_bytes = C * HW * itemsize
    max_bn_by_bytes = max(1, block_bytes_target // slab_bytes)
    max_bn_by_grid = max(1, N // min(N, 4))
    bn_cap = int(min(N, max_bn_by_bytes, max_bn_by_grid))
    Bn = 1
    for d in range(1, bn_cap + 1):
        if N % d == 0:
            Bn = d
    grid = (N // Bn,)

    b1r = params["b1"].reshape(1, Ch)
    b2r = params["b2"].reshape(1, C)

    # Advisory cost model: 1 read + 1 write of x, tiny FCs, one sigmoid per (n, c).
    flops = 2 * N * C * HW + 4 * N * C * Ch
    bytes_accessed = 2 * N * C * HW * itemsize + (2 * C * Ch + C + Ch) * 4
    cost = pl.CostEstimate(flops=flops, transcendentals=N * C,
                           bytes_accessed=bytes_accessed)

    out3 = pl.pallas_call(
        partial(_se_block_kernel, inv_hw=1.0 / HW),
        out_shape=jax.ShapeDtypeStruct((N, C, HW), x.dtype),
        grid=grid,
        in_specs=[
            pl.BlockSpec((Bn, C, HW), lambda n: (n, 0, 0)),   # x slab (Bn batch items)
            pl.BlockSpec((Ch, C), lambda n: (0, 0)),          # fc1 weight (resident)
            pl.BlockSpec((1, Ch), lambda n: (0, 0)),          # fc1 bias
            pl.BlockSpec((C, Ch), lambda n: (0, 0)),          # fc2 weight
            pl.BlockSpec((1, C), lambda n: (0, 0)),           # fc2 bias
        ],
        out_specs=pl.BlockSpec((Bn, C, HW), lambda n: (n, 0, 0)),
        compiler_params=pltpu.CompilerParams(
            dimension_semantics=("parallel",),        # megacore split on v7x
            vmem_limit_bytes=48 * 1024 * 1024,        # > v5e's 16 MiB default, < v7x physical
        ),
        cost_estimate=cost,
        input_output_aliases=({0: 0} if donate_x else {}),
    )(x3, params["w1"], b1r, params["w2"], b2r)

    return out3.reshape(N, C, H, W)


# ---------------------------------------------------------------------------
# Pure-JAX reference (correctness check only)
# ---------------------------------------------------------------------------
def _reference(x, params):
    y = jnp.mean(x, axis=(2, 3))                                     # (N, C)
    y = jnp.maximum(y @ params["w1"].T + params["b1"], 0.0)          # (N, Ch)
    y = jax.nn.sigmoid(y @ params["w2"].T + params["b2"])            # (N, C)
    return x * y[:, :, None, None]


# ---------------------------------------------------------------------------
if __name__ == "__main__":
    # Toy correctness shapes (production benchmarking should use real shapes +
    # xprof min-of-N timing; at this size everything is fixed overhead).
    N, C, H, W = 2, 64, 16, 16
    reduction = 16
    Ch = C // reduction  # 4

    key = jax.random.PRNGKey(0)
    ks = jax.random.split(key, 5)
    params = {
        "w1": jax.random.normal(ks[0], (Ch, C), jnp.float32) * 0.2,   # fc1.weight
        "b1": jax.random.normal(ks[1], (Ch,), jnp.float32) * 0.1,     # fc1.bias
        "w2": jax.random.normal(ks[2], (C, Ch), jnp.float32) * 0.2,   # fc2.weight
        "b2": jax.random.normal(ks[3], (C,), jnp.float32) * 0.1,      # fc2.bias
    }
    x = jax.random.normal(ks[4], (N, C, H, W), jnp.float32)

    out = jax.block_until_ready(se_block(x, params))
    ref = jax.block_until_ready(_reference(x, params))

    assert out.shape == (N, C, H, W)
    assert jnp.allclose(out, ref, atol=1e-4, rtol=1e-4)

    print("KERNEL_OK")
</pallas_src>

<mosaic_0001>
module attributes {stable_mosaic.version = 11 : i64} {
  func.func @_se_block_kernel(%arg0: i32, %arg1: memref<1x64x256xf32, #tpu.memory_space<vmem>>, %arg2: memref<4x64xf32, #tpu.memory_space<vmem>>, %arg3: memref<1x4xf32, #tpu.memory_space<vmem>>, %arg4: memref<64x4xf32, #tpu.memory_space<vmem>>, %arg5: memref<1x64xf32, #tpu.memory_space<vmem>>, %arg6: memref<1x64x256xf32, #tpu.memory_space<vmem>>) attributes {dimension_semantics = [#tpu.dimension_semantics<parallel>], iteration_bounds = array<i64: 2>, scalar_prefetch = 0 : i64, scratch_operands = 0 : i64, tpu.core_type = #tpu.core_type<tc>, window_params = [{transform_indices = @transform_0, window_bounds = array<i64: 1, 64, 256>}, {pipeline_mode = #tpu.pipeline_mode<synchronous>, transform_indices = @transform_1, window_bounds = array<i64: 4, 64>}, {pipeline_mode = #tpu.pipeline_mode<synchronous>, transform_indices = @transform_2, window_bounds = array<i64: 1, 4>}, {pipeline_mode = #tpu.pipeline_mode<synchronous>, transform_indices = @transform_3, window_bounds = array<i64: 64, 4>}, {pipeline_mode = #tpu.pipeline_mode<synchronous>, transform_indices = @transform_4, window_bounds = array<i64: 1, 64>}, {transform_indices = @transform_5, window_bounds = array<i64: 1, 64, 256>}]} {
    %c0 = arith.constant 0 : index
    %c0_0 = arith.constant 0 : index
    %c0_1 = arith.constant 0 : index
    %0 = vector.load %arg1[%c0, %c0_0, %c0_1] : memref<1x64x256xf32, #tpu.memory_space<vmem>>, vector<1x64x256xf32>
    %cst = arith.constant dense<0.000000e+00> : vector<1x64xf32>
    %1 = vector.multi_reduction <add>, %0, %cst [2] : vector<1x64x256xf32> to vector<1x64xf32>
    %cst_2 = arith.constant 3.906250e-03 : f32
    %2 = vector.broadcast %cst_2 : f32 to vector<1x64xf32>
    %3 = arith.mulf %1, %2 : vector<1x64xf32>
    %4 = vector.shape_cast %3 : vector<1x64xf32> to vector<1x1x64xf32>
    %c0_3 = arith.constant 0 : index
    %c0_4 = arith.constant 0 : index
    %5 = vector.load %arg2[%c0_3, %c0_4] : memref<4x64xf32, #tpu.memory_space<vmem>>, vector<4x64xf32>
    %6 = vector.shape_cast %5 : vector<4x64xf32> to vector<1x4x64xf32>
    %7 = vector.broadcast %4 : vector<1x1x64xf32> to vector<1x4x64xf32>
    %8 = arith.mulf %7, %6 : vector<1x4x64xf32>
    %cst_5 = arith.constant dense<0.000000e+00> : vector<1x4xf32>
    %9 = vector.multi_reduction <add>, %8, %cst_5 [2] : vector<1x4x64xf32> to vector<1x4xf32>
    %c0_6 = arith.constant 0 : index
    %c0_7 = arith.constant 0 : index
    %10 = vector.load %arg3[%c0_6, %c0_7] : memref<1x4xf32, #tpu.memory_space<vmem>>, vector<1x4xf32>
    %11 = arith.addf %9, %10 : vector<1x4xf32>
    %cst_8 = arith.constant 0.000000e+00 : f32
    %12 = vector.broadcast %cst_8 : f32 to vector<1x4xf32>
    %13 = arith.maximumf %11, %12 : vector<1x4xf32>
    %14 = vector.shape_cast %13 : vector<1x4xf32> to vector<1x1x4xf32>
    %c0_9 = arith.constant 0 : index
    %c0_10 = arith.constant 0 : index
    %15 = vector.load %arg4[%c0_9, %c0_10] : memref<64x4xf32, #tpu.memory_space<vmem>>, vector<64x4xf32>
    %16 = vector.shape_cast %15 : vector<64x4xf32> to vector<1x64x4xf32>
    %17 = vector.broadcast %14 : vector<1x1x4xf32> to vector<1x64x4xf32>
    %18 = arith.mulf %17, %16 : vector<1x64x4xf32>
    %cst_11 = arith.constant dense<0.000000e+00> : vector<1x64xf32>
    %19 = vector.multi_reduction <add>, %18, %cst_11 [2] : vector<1x64x4xf32> to vector<1x64xf32>
    %c0_12 = arith.constant 0 : index
    %c0_13 = arith.constant 0 : index
    %20 = vector.load %arg5[%c0_12, %c0_13] : memref<1x64xf32, #tpu.memory_space<vmem>>, vector<1x64xf32>
    %21 = arith.addf %19, %20 : vector<1x64xf32>
    %cst_14 = arith.constant 0.000000e+00 : f32
    %22 = vector.broadcast %cst_14 : f32 to vector<1x64xf32>
    %23 = arith.subf %22, %21 : vector<1x64xf32>
    %24 = math.exp %23 : vector<1x64xf32>
    %cst_15 = arith.constant 1.000000e+00 : f32
    %25 = vector.broadcast %cst_15 : f32 to vector<1x64xf32>
    %26 = arith.addf %25, %24 : vector<1x64xf32>
    %cst_16 = arith.constant 1.000000e+00 : f32
    %27 = vector.broadcast %cst_16 : f32 to vector<1x64xf32>
    %28 = arith.divf %27, %26 : vector<1x64xf32>
    %29 = vector.shape_cast %28 : vector<1x64xf32> to vector<1x64x1xf32>
    %30 = vector.broadcast %29 : vector<1x64x1xf32> to vector<1x64x256xf32>
    %31 = arith.mulf %0, %30 : vector<1x64x256xf32>
    %c0_17 = arith.constant 0 : index
    %c0_18 = arith.constant 0 : index
    %c0_19 = arith.constant 0 : index
    %32 = vector.load %arg6[%c0_17, %c0_18, %c0_19] : memref<1x64x256xf32, #tpu.memory_space<vmem>>, vector<1x64x256xf32>
    tpu.vector_store %arg6[%c0_17, %c0_18, %c0_19], %31 {strides = array<i32>} : memref<1x64x256xf32, #tpu.memory_space<vmem>>, vector<1x64x256xf32>,
    return
  }
  func.func @transform_0(%arg0: i32) -> (i32, i32, i32) {
    %c0_i32 = arith.constant 0 : i32
    %c0_i32_0 = arith.constant 0 : i32
    %c0_i32_1 = arith.constant 0 : i32
    return %arg0, %c0_i32, %c0_i32_0 : i32, i32, i32
  }
  func.func @transform_1(%arg0: i32) -> (i32, i32) {
    %c0_i32 = arith.constant 0 : i32
    %c0_i32_0 = arith.constant 0 : i32
    %c0_i32_1 = arith.constant 0 : i32
    return %c0_i32, %c0_i32_0 : i32, i32
  }
  func.func @transform_2(%arg0: i32) -> (i32, i32) {
    %c0_i32 = arith.constant 0 : i32
    %c0_i32_0 = arith.constant 0 : i32
    %c0_i32_1 = arith.constant 0 : i32
    return %c0_i32, %c0_i32_0 : i32, i32
  }
  func.func @transform_3(%arg0: i32) -> (i32, i32) {
    %c0_i32 = arith.constant 0 : i32
    %c0_i32_0 = arith.constant 0 : i32
    %c0_i32_1 = arith.constant 0 : i32
    return %c0_i32, %c0_i32_0 : i32, i32
  }
  func.func @transform_4(%arg0: i32) -> (i32, i32) {
    %c0_i32 = arith.constant 0 : i32
    %c0_i32_0 = arith.constant 0 : i32
    %c0_i32_1 = arith.constant 0 : i32
    return %c0_i32, %c0_i32_0 : i32, i32
  }
  func.func @transform_5(%arg0: i32) -> (i32, i32, i32) {
    %c0_i32 = arith.constant 0 : i32
    %c0_i32_0 = arith.constant 0 : i32
    %c0_i32_1 = arith.constant 0 : i32
    return %arg0, %c0_i32, %c0_i32_0 : i32, i32, i32
  }
}

</mosaic_0001>

<llo_original>
// kernel: tpu_custom_call.1
$region0: #{tpu_custom_call.1}
  #allocation0 [shape = 'u32[]', space=smem, size = 0x4, offset = 0x4, fixed_abs, tag = 'smem constant byte address 0x4 - core index']
  #allocation1 [shape = 'u32[144,128]{1,0:T(1,128)}', space=vmem, size = 0x12000, scoped, tag = 'internal scratch']
  %s0 = inlined_call_operand.hbm [shape: f32[2,64,256], index: 0, kind: input, shape index: {}]
  %s1 = inlined_call_operand.vmem [shape: f32[4,64], index: 1, kind: input, shape index: {}]
  %s2 = inlined_call_operand.vmem [shape: f32[1,4], index: 2, kind: input, shape index: {}]
  %s3 = inlined_call_operand.vmem [shape: f32[64,4], index: 3, kind: input, shape index: {}]
  %s4 = inlined_call_operand.vmem [shape: f32[1,64], index: 4, kind: input, shape index: {}]
  %s5 = inlined_call_operand.hbm [shape: f32[2,64,256], index: 5, kind: output, shape index: {}]
  %s6 = sld [smem:[#allocation0]]
  $region57: #{tpu_custom_call.1} parent=0
    _
  %s8 = ssub.s32 1, %s6
  %s9 = scalar_select 0, %s8, %s6
  $region1: #{tpu_custom_call.1} parent=0
    #allocation2 [shape = 'u8[131072]{0}', space=vmem, size = 0x20000, scoped, tag = 'input window, operand 0']
    #allocation3 [shape = 's32[2]{0}', space=sflag, size = 0x8, scoped, tag = 'scoped memory for tpu_custom_call.1']
    #allocation4 [shape = 's32[2]{0}', space=sflag, size = 0x8, scoped, tag = 'scoped memory for tpu_custom_call.1']
    #allocation5 [shape = 'u8[131072]{0}', space=vmem, size = 0x20000, scoped, tag = 'output window, operand 0']
    %10 = vsyncpa [#allocation3], 0
    %s11 = scalar_lea.sflag [#allocation3], 1
    %12 = vsyncpa %s11, 0
    %13 = vsyncpa [#allocation4], 0
    %s14 = scalar_lea.sflag [#allocation4], 1
    %15 = vsyncpa %s14, 0
    loop: start=0, step=1, limit=4
    $region2: #{tpu_custom_call.1} parent=1 // loop_pre_header
      _
    $region3: #{tpu_custom_call.1} parent=1 // loop_header
      %s17 = sphi 0, %s21
      %p18 = scmp.ge.s32.totalorder %s17, 4
      %s27 = sphi 0, %s29
      %s30 = sphi 0, %s27
      %s31 = sphi 0, %s30
      %s47 = sphi 0, %s31
      %s51 = sphi 0, %s51
      %s53 = sphi 0, %s51
      %s54 = sphi 0, %s53
      %s68 = sphi 0, %s54
      %s72 = sphi 0, %s72
      %s74 = sphi 0, %s72
      %s75 = sphi 0, %s74
      %s89 = sphi 0, %s75
      %s93 = sphi 0, %s93
      %s95 = sphi 0, %s93
      %s96 = sphi 0, %s95
      %s110 = sphi 0, %s96
      %s114 = sphi 0, %s114
      %s116 = sphi 0, %s114
      %s117 = sphi 0, %s116
      %s131 = sphi 0, %s117
      %s137 = sphi 0, %s139
      %s140 = sphi 0, %s137
      %s141 = sphi 0, %s140
      %s157 = sphi 0, %s141
    $region4: #{tpu_custom_call.1} parent=1 // loop_header_branch
      %20 = sbr.rel (%p18) target = $region8
    $region5: #{tpu_custom_call.1} parent=1 // loop_body
      %s22 = ssub.s32 %s17, 1
      %s23 = ssub.s32 %s17, 2
      %s24 = sadd.s32 %s17, 1
      %s25 = ssub.s32 %s17, %s24
      %p26 = scmp.eq.s32.totalorder %s25, 0
      %s28 = sadd.s32 %s27, 1
      %s29 = scalar_select %p26, %s27, %s28
      %p32 = pneg %p26
      %p33 = scmp.eq.s32.totalorder %s17, 1
      %p34 = por %p32, %p33
      %p35 = scmp.ne.s32.totalorder %s27, %s30
      %p36 = scmp.eq.s32.totalorder %s17, 0
      %p37 = por %p35, %p36
      %p38 = scmp.ne.s32.totalorder %s27, %s30
      %p39 = scmp.eq.s32.totalorder %s22, 1
      %p40 = por %p38, %p39
      %p41 = scmp.ne.s32.totalorder %s30, %s31
      %p42 = scmp.eq.s32.totalorder %s22, 0
      %p43 = por %p41, %p42
      %p44 = scmp.ne.s32.totalorder %s30, %s31
      %p45 = scmp.eq.s32.totalorder %s23, 1
      %p46 = por %p44, %p45
      %p48 = scmp.ne.s32.totalorder %s31, %s47
      %p49 = scmp.eq.s32.totalorder %s23, 0
      %p50 = por %p48, %p49
      %s52 = sadd.s32 %s51, 1
      %p55 = scmp.eq.s32.totalorder %s17, 1
      %p56 = scmp.ne.s32.totalorder %s51, %s53
      %p57 = scmp.eq.s32.totalorder %s17, 0
      %p58 = por %p56, %p57
      %p59 = scmp.ne.s32.totalorder %s51, %s53
      %p60 = scmp.eq.s32.totalorder %s22, 1
      %p61 = por %p59, %p60
      %p62 = scmp.ne.s32.totalorder %s53, %s54
      %p63 = scmp.eq.s32.totalorder %s22, 0
      %p64 = por %p62, %p63
      %p65 = scmp.ne.s32.totalorder %s53, %s54
      %p66 = scmp.eq.s32.totalorder %s23, 1
      %p67 = por %p65, %p66
      %p69 = scmp.ne.s32.totalorder %s54, %s68
      %p70 = scmp.eq.s32.totalorder %s23, 0
      %p71 = por %p69, %p70
      %s73 = sadd.s32 %s72, 1
      %p76 = scmp.eq.s32.totalorder %s17, 1
      %p77 = scmp.ne.s32.totalorder %s72, %s74
      %p78 = scmp.eq.s32.totalorder %s17, 0
      %p79 = por %p77, %p78
      %p80 = scmp.ne.s32.totalorder %s72, %s74
      %p81 = scmp.eq.s32.totalorder %s22, 1
      %p82 = por %p80, %p81
      %p83 = scmp.ne.s32.totalorder %s74, %s75
      %p84 = scmp.eq.s32.totalorder %s22, 0
      %p85 = por %p83, %p84
      %p86 = scmp.ne.s32.totalorder %s74, %s75
      %p87 = scmp.eq.s32.totalorder %s23, 1
      %p88 = por %p86, %p87
      %p90 = scmp.ne.s32.totalorder %s75, %s89
      %p91 = scmp.eq.s32.totalorder %s23, 0
      %p92 = por %p90, %p91
      %s94 = sadd.s32 %s93, 1
      %p97 = scmp.eq.s32.totalorder %s17, 1
      %p98 = scmp.ne.s32.totalorder %s93, %s95
      %p99 = scmp.eq.s32.totalorder %s17, 0
      %p100 = por %p98, %p99
      %p101 = scmp.ne.s32.totalorder %s93, %s95
      %p102 = scmp.eq.s32.totalorder %s22, 1
      %p103 = por %p101, %p102
      %p104 = scmp.ne.s32.totalorder %s95, %s96
      %p105 = scmp.eq.s32.totalorder %s22, 0
      %p106 = por %p104, %p105
      %p107 = scmp.ne.s32.totalorder %s95, %s96
      %p108 = scmp.eq.s32.totalorder %s23, 1
      %p109 = por %p107, %p108
      %p111 = scmp.ne.s32.totalorder %s96, %s110
      %p112 = scmp.eq.s32.totalorder %s23, 0
      %p113 = por %p111, %p112
      %s115 = sadd.s32 %s114, 1
      %p118 = scmp.eq.s32.totalorder %s17, 1
      %p119 = scmp.ne.s32.totalorder %s114, %s116
      %p120 = scmp.eq.s32.totalorder %s17, 0
      %p121 = por %p119, %p120
      %p122 = scmp.ne.s32.totalorder %s114, %s116
      %p123 = scmp.eq.s32.totalorder %s22, 1
      %p124 = por %p122, %p123
      %p125 = scmp.ne.s32.totalorder %s116, %s117
      %p126 = scmp.eq.s32.totalorder %s22, 0
      %p127 = por %p125, %p126
      %p128 = scmp.ne.s32.totalorder %s116, %s117
      %p129 = scmp.eq.s32.totalorder %s23, 1
      %p130 = por %p128, %p129
      %p132 = scmp.ne.s32.totalorder %s117, %s131
      %p133 = scmp.eq.s32.totalorder %s23, 0
      %p134 = por %p132, %p133
      %s135 = ssub.s32 %s17, %s24
      %p136 = scmp.eq.s32.totalorder %s135, 0
      %s138 = sadd.s32 %s137, 1
      %s139 = scalar_select %p136, %s137, %s138
      %p142 = pneg %p136
      %p143 = scmp.eq.s32.totalorder %s17, 1
      %p144 = por %p142, %p143
      %p145 = scmp.ne.s32.totalorder %s137, %s140
      %p146 = scmp.eq.s32.totalorder %s17, 0
      %p147 = por %p145, %p146
      %p148 = scmp.ne.s32.totalorder %s137, %s140
      %p149 = scmp.eq.s32.totalorder %s22, 1
      %p150 = por %p148, %p149
      %p151 = scmp.ne.s32.totalorder %s140, %s141
      %p152 = scmp.eq.s32.totalorder %s22, 0
      %p153 = por %p151, %p152
      %p154 = scmp.ne.s32.totalorder %s140, %s141
      %p155 = scmp.eq.s32.totalorder %s23, 1
      %p156 = por %p154, %p155
      %p158 = scmp.ne.s32.totalorder %s141, %s157
      %p159 = scmp.eq.s32.totalorder %s23, 0
      %p160 = por %p158, %p159
      %p161 = scmp.le.s32.totalorder 1, %s17
      %p162 = scmp.lt.s32.totalorder %s17, 3
      %p163 = pnand %p161, %p162
      %p164 = pneg %p163
      // Predicated region
      $region9: #{tpu_custom_call.1} parent=5 // pred_check
        _
      $region10: #{tpu_custom_call.1} parent=5 // pred_check_branch
        %166 = sbr.rel (%p163) target = $region12
      $region11: #{tpu_custom_call.1} parent=5 // pred_region
        %s167 = ssub.s32 %s17, 1
        // Predicated region
        $region13: #{tpu_custom_call.1} parent=11 // pred_check
          %p168 = pneg %p64
        $region14: #{tpu_custom_call.1} parent=11 // pred_check_branch
          %170 = sbr.rel (%p168) target = $region16
        $region15: #{tpu_custom_call.1} parent=11 // pred_region
          _
        $region16: #{tpu_custom_call.1} parent=11 // pred_fallthru
          _
        // Predicated region
        $region17: #{tpu_custom_call.1} parent=11 // pred_check
          %p171 = pneg %p85
        $region18: #{tpu_custom_call.1} parent=11 // pred_check_branch
          %173 = sbr.rel (%p171) target = $region20
        $region19: #{tpu_custom_call.1} parent=11 // pred_region
          _
        $region20: #{tpu_custom_call.1} parent=11 // pred_fallthru
          _
        // Predicated region
        $region21: #{tpu_custom_call.1} parent=11 // pred_check
          %p174 = pneg %p106
        $region22: #{tpu_custom_call.1} parent=11 // pred_check_branch
          %176 = sbr.rel (%p174) target = $region24
        $region23: #{tpu_custom_call.1} parent=11 // pred_region
          _
        $region24: #{tpu_custom_call.1} parent=11 // pred_fallthru
          _
        // Predicated region
        $region25: #{tpu_custom_call.1} parent=11 // pred_check
          %p177 = pneg %p127
        $region26: #{tpu_custom_call.1} parent=11 // pred_check_branch
          %179 = sbr.rel (%p177) target = $region28
        $region27: #{tpu_custom_call.1} parent=11 // pred_region
          _
        $region28: #{tpu_custom_call.1} parent=11 // pred_fallthru
          _
      $region12: #{tpu_custom_call.1} parent=5 // pred_fallthru
        _
      %p180 = scmp.lt.s32.totalorder %s17, 2
      // Predicated region
      $region29: #{tpu_custom_call.1} parent=5 // pred_check
        %p181 = pneg %p180
      $region30: #{tpu_custom_call.1} parent=5 // pred_check_branch
        %183 = sbr.rel (%p181) target = $region32
      $region31: #{tpu_custom_call.1} parent=5 // pred_region
        // Predicated region
        $region33: #{tpu_custom_call.1} parent=31 // pred_check
          %p184 = pneg %p37
        $region34: #{tpu_custom_call.1} parent=31 // pred_check_branch
          %186 = sbr.rel (%p184) target = $region36
        $region35: #{tpu_custom_call.1} parent=31 // pred_region
          %s187 = sand.u32 %s27, 1
          %s188 = scalar_lea.sflag [#allocation3], %s187
          %s189 = sand.u32 %s27, 1
          %s190 = smul.addr %s189, 128
          %s191 = scalar_lea.vmem [#allocation2], %s190
          %s193 = ssub.s32 2048, 2048
          %194 = vsyncadd %s188, %s193
          %s195 = smul.addr %s17, 16
          %s196 = smul.addr %s195, 128
          %s197 = scalar_lea.hbm %s0, %s196
          %s198 = sshll.u32 %s191, 4
          %s199 = int_to_ptr.vmem [resolvable:$true] %s198
          %204 = dma.hbm_to_vmem [thread:$0]  %s197, 2048, %s199, %s188, 256, 256, 16
        $region36: #{tpu_custom_call.1} parent=31 // pred_fallthru
          _
      $region32: #{tpu_custom_call.1} parent=5 // pred_fallthru
        _
      %p205 = scmp.le.s32.totalorder 1, %s17
      %p206 = scmp.lt.s32.totalorder %s17, 3
      %p207 = pnand %p205, %p206
      %p208 = pneg %p207
      // Predicated region
      $region37: #{tpu_custom_call.1} parent=5 // pred_check
        _
      $region38: #{tpu_custom_call.1} parent=5 // pred_check_branch
        %210 = sbr.rel (%p207) target = $region40
      $region39: #{tpu_custom_call.1} parent=5 // pred_region
        %s211 = ssub.s32 %s17, 1
        %s212 = sand.u32 %s30, 1
        %s213 = scalar_lea.sflag [#allocation3], %s212
        %s214 = sand.u32 %s30, 1
        %s215 = smul.addr %s214, 128
        %s216 = scalar_lea.vmem [#allocation2], %s215
        // Predicated region
        $region41: #{tpu_custom_call.1} parent=39 // pred_check
          %p217 = pneg %p43
        $region42: #{tpu_custom_call.1} parent=39 // pred_check_branch
          %219 = sbr.rel (%p217) target = $region44
        $region43: #{tpu_custom_call.1} parent=39 // pred_region
          %220 = dma.done %s213, 2048
        $region44: #{tpu_custom_call.1} parent=39 // pred_fallthru
          _
        %s221 = sand.u32 %s30, 1
        %s222 = scalar_lea.sflag [#allocation3], %s221
        %s223 = sand.u32 %s30, 1
        %s224 = smul.addr %s223, 128
        %s225 = scalar_lea.vmem [#allocation2], %s224
        %p226 = pneg %p43
        %p227 = pneg %p40
        %p228 = pneg %p64
        %p229 = pneg %p61
        %p230 = pneg %p85
        %p231 = pneg %p82
        %p232 = pneg %p106
        %p233 = pneg %p103
        %p234 = pneg %p127
        %p235 = pneg %p124
        %p236 = pneg %p153
        %p237 = pneg %p150
        %s238 = sand.u32 %s140, 1
        %s239 = scalar_lea.sflag [#allocation4], %s238
        %s240 = sand.u32 %s140, 1
        %s241 = smul.addr %s240, 128
        %s242 = scalar_lea.vmem [#allocation5], %s241
        %v243 = vld [vmem:[%s216] sm:$0xff]
        %v244 = vld [vmem:[%s216 + $0x8] sm:$0xff]
        %v245 = vld [vmem:[%s216 + $0x10] sm:$0xff]
        %v246 = vld [vmem:[%s216 + $0x18] sm:$0xff]
        %v247 = vld [vmem:[%s216 + $0x20] sm:$0xff]
        %v248 = vld [vmem:[%s216 + $0x28] sm:$0xff]
        %v249 = vld [vmem:[%s216 + $0x30] sm:$0xff]
        %v250 = vld [vmem:[%s216 + $0x38] sm:$0xff]
        %v251 = vld [vmem:[%s216 + $0x40] sm:$0xff]
        %v252 = vld [vmem:[%s216 + $0x48] sm:$0xff]
        %v253 = vld [vmem:[%s216 + $0x50] sm:$0xff]
        %v254 = vld [vmem:[%s216 + $0x58] sm:$0xff]
        %v255 = vld [vmem:[%s216 + $0x60] sm:$0xff]
        %v256 = vld [vmem:[%s216 + $0x68] sm:$0xff]
        %v257 = vld [vmem:[%s216 + $0x70] sm:$0xff]
        %v258 = vld [vmem:[%s216 + $0x78] sm:$0xff]
        %v259 = vadd.f32 %v243, %v244
        %260 = vadd.xlane.f32.xlu0 %v259
        %v261 = vpop.xlane.xlu0 %260
        %v262 = vadd.f32 %v245, %v246
        %263 = vadd.xlane.f32.xlu0 %v262
        %v264 = vpop.xlane.xlu0 %263
        %v265 = vadd.f32 %v247, %v248
        %266 = vadd.xlane.f32.xlu0 %v265
        %v267 = vpop.xlane.xlu0 %266
        %v268 = vadd.f32 %v249, %v250
        %269 = vadd.xlane.f32.xlu0 %v268
        %v270 = vpop.xlane.xlu0 %269
        %v271 = vadd.f32 %v251, %v252
        %272 = vadd.xlane.f32.xlu0 %v271
        %v273 = vpop.xlane.xlu0 %272
        %v274 = vadd.f32 %v253, %v254
        %275 = vadd.xlane.f32.xlu0 %v274
        %v276 = vpop.xlane.xlu0 %275
        %v277 = vadd.f32 %v255, %v256
        %278 = vadd.xlane.f32.xlu0 %v277
        %v279 = vpop.xlane.xlu0 %278
        %v280 = vadd.f32 %v257, %v258
        %281 = vadd.xlane.f32.xlu0 %v280
        %v282 = vpop.xlane.xlu0 %281
        %v283 = vmul.f32 %v261, 0.00390625
        %v284 = vmul.f32 %v264, 0.00390625
        %v285 = vmul.f32 %v267, 0.00390625
        %v286 = vmul.f32 %v270, 0.00390625
        %v287 = vmul.f32 %v273, 0.00390625
        %v288 = vmul.f32 %v276, 0.00390625
        %v289 = vmul.f32 %v279, 0.00390625
        %v290 = vmul.f32 %v282, 0.00390625
        %v291 = vld [vmem:[%s1] sm:$0xf]
        %v293 = vlaneseq
        %v294 = vshrl.u32 %v293, 7
        %v295 = vsub.s32 0, %v294
        %v296 = vrot.slane %v291, %v295
        %298 = vbcast.lane.b32.xlu0 %v296, 256
        %v299 = vpop.permute.xlu0 %298
        %s301 = sor.u32 256, 8
        %302 = vbcast.lane.b32.xlu0 %v296, %s301
        %v303 = vpop.permute.xlu0 %302
        %s305 = sor.u32 256, 16
        %306 = vbcast.lane.b32.xlu0 %v296, %s305
        %v307 = vpop.permute.xlu0 %306
        %s309 = sor.u32 256, 24
        %310 = vbcast.lane.b32.xlu0 %v296, %s309
        %v311 = vpop.permute.xlu0 %310
        %s313 = sor.u32 256, 32
        %314 = vbcast.lane.b32.xlu0 %v296, %s313
        %v315 = vpop.permute.xlu0 %314
        %s317 = sor.u32 256, 40
        %318 = vbcast.lane.b32.xlu0 %v296, %s317
        %v319 = vpop.permute.xlu0 %318
        %s321 = sor.u32 256, 48
        %322 = vbcast.lane.b32.xlu0 %v296, %s321
        %v323 = vpop.permute.xlu0 %322
        %s325 = sor.u32 256, 56
        %326 = vbcast.lane.b32.xlu0 %v296, %s325
        %v327 = vpop.permute.xlu0 %326
        %v328 = vlaneseq
        %v329 = vshrl.u32 %v328, 7
        %v330 = vsub.s32 1, %v329
        %v331 = vrot.slane %v291, %v330
        %333 = vbcast.lane.b32.xlu0 %v331, 256
        %v334 = vpop.permute.xlu0 %333
        %s336 = sor.u32 256, 8
        %337 = vbcast.lane.b32.xlu0 %v331, %s336
        %v338 = vpop.permute.xlu0 %337
        %s340 = sor.u32 256, 16
        %341 = vbcast.lane.b32.xlu0 %v331, %s340
        %v342 = vpop.permute.xlu0 %341
        %s344 = sor.u32 256, 24
        %345 = vbcast.lane.b32.xlu0 %v331, %s344
        %v346 = vpop.permute.xlu0 %345
        %s348 = sor.u32 256, 32
        %349 = vbcast.lane.b32.xlu0 %v331, %s348
        %v350 = vpop.permute.xlu0 %349
        %s352 = sor.u32 256, 40
        %353 = vbcast.lane.b32.xlu0 %v331, %s352
        %v354 = vpop.permute.xlu0 %353
        %s356 = sor.u32 256, 48
        %357 = vbcast.lane.b32.xlu0 %v331, %s356
        %v358 = vpop.permute.xlu0 %357
        %s360 = sor.u32 256, 56
        %361 = vbcast.lane.b32.xlu0 %v331, %s360
        %v362 = vpop.permute.xlu0 %361
        %v363 = vlaneseq
        %v364 = vshrl.u32 %v363, 7
        %v365 = vsub.s32 2, %v364
        %v366 = vrot.slane %v291, %v365
        %368 = vbcast.lane.b32.xlu0 %v366, 256
        %v369 = vpop.permute.xlu0 %368
        %s371 = sor.u32 256, 8
        %372 = vbcast.lane.b32.xlu0 %v366, %s371
        %v373 = vpop.permute.xlu0 %372
        %s375 = sor.u32 256, 16
        %376 = vbcast.lane.b32.xlu0 %v366, %s375
        %v377 = vpop.permute.xlu0 %376
        %s379 = sor.u32 256, 24
        %380 = vbcast.lane.b32.xlu0 %v366, %s379
        %v381 = vpop.permute.xlu0 %380
        %s383 = sor.u32 256, 32
        %384 = vbcast.lane.b32.xlu0 %v366, %s383
        %v385 = vpop.permute.xlu0 %384
        %s387 = sor.u32 256, 40
        %388 = vbcast.lane.b32.xlu0 %v366, %s387
        %v389 = vpop.permute.xlu0 %388
        %s391 = sor.u32 256, 48
        %392 = vbcast.lane.b32.xlu0 %v366, %s391
        %v393 = vpop.permute.xlu0 %392
        %s395 = sor.u32 256, 56
        %396 = vbcast.lane.b32.xlu0 %v366, %s395
        %v397 = vpop.permute.xlu0 %396
        %v398 = vlaneseq
        %v399 = vshrl.u32 %v398, 7
        %v400 = vsub.s32 3, %v399
        %v401 = vrot.slane %v291, %v400
        %403 = vbcast.lane.b32.xlu0 %v401, 256
        %v404 = vpop.permute.xlu0 %403
        %s406 = sor.u32 256, 8
        %407 = vbcast.lane.b32.xlu0 %v401, %s406
        %v408 = vpop.permute.xlu0 %407
        %s410 = sor.u32 256, 16
        %411 = vbcast.lane.b32.xlu0 %v401, %s410
        %v412 = vpop.permute.xlu0 %411
        %s414 = sor.u32 256, 24
        %415 = vbcast.lane.b32.xlu0 %v401, %s414
        %v416 = vpop.permute.xlu0 %415
        %s418 = sor.u32 256, 32
        %419 = vbcast.lane.b32.xlu0 %v401, %s418
        %v420 = vpop.permute.xlu0 %419
        %s422 = sor.u32 256, 40
        %423 = vbcast.lane.b32.xlu0 %v401, %s422
        %v424 = vpop.permute.xlu0 %423
        %s426 = sor.u32 256, 48
        %427 = vbcast.lane.b32.xlu0 %v401, %s426
        %v428 = vpop.permute.xlu0 %427
        %s430 = sor.u32 256, 56
        %431 = vbcast.lane.b32.xlu0 %v401, %s430
        %v432 = vpop.permute.xlu0 %431
        %v465 = vmul.f32 %v283, %v299
        %v466 = vmul.f32 %v284, %v303
        %v467 = vmul.f32 %v285, %v307
        %v468 = vmul.f32 %v286, %v311
        %v469 = vmul.f32 %v287, %v315
        %v470 = vmul.f32 %v288, %v319
        %v471 = vmul.f32 %v289, %v323
        %v472 = vmul.f32 %v290, %v327
        %v473 = vmul.f32 %v283, %v334
        %v474 = vmul.f32 %v284, %v338
        %v475 = vmul.f32 %v285, %v342
        %v476 = vmul.f32 %v286, %v346
        %v477 = vmul.f32 %v287, %v350
        %v478 = vmul.f32 %v288, %v354
        %v479 = vmul.f32 %v289, %v358
        %v480 = vmul.f32 %v290, %v362
        %v481 = vmul.f32 %v283, %v369
        %v482 = vmul.f32 %v284, %v373
        %v483 = vmul.f32 %v285, %v377
        %v484 = vmul.f32 %v286, %v381
        %v485 = vmul.f32 %v287, %v385
        %v486 = vmul.f32 %v288, %v389
        %v487 = vmul.f32 %v289, %v393
        %v488 = vmul.f32 %v290, %v397
        %v489 = vmul.f32 %v283, %v404
        %v490 = vmul.f32 %v284, %v408
        %v491 = vmul.f32 %v285, %v412
        %v492 = vmul.f32 %v286, %v416
        %v493 = vmul.f32 %v287, %v420
        %v494 = vmul.f32 %v288, %v424
        %v495 = vmul.f32 %v289, %v428
        %v496 = vmul.f32 %v290, %v432
        %529 = vset.pattern.permute.xlu0 0
        %530 = vperm.xlu0 %529, %v465
        %v531 = vpop.permute.xlu0 %530
        %532 = vset.pattern.permute.xlu0 0
        %533 = vperm.xlu0 %532, %v466
        %v534 = vpop.permute.xlu0 %533
        %535 = vset.pattern.permute.xlu0 0
        %536 = vperm.xlu0 %535, %v467
        %v537 = vpop.permute.xlu0 %536
        %538 = vset.pattern.permute.xlu0 0
        %539 = vperm.xlu0 %538, %v468
        %v540 = vpop.permute.xlu0 %539
        %541 = vset.pattern.permute.xlu0 0
        %542 = vperm.xlu0 %541, %v469
        %v543 = vpop.permute.xlu0 %542
        %544 = vset.pattern.permute.xlu0 0
        %545 = vperm.xlu0 %544, %v470
        %v546 = vpop.permute.xlu0 %545
        %547 = vset.pattern.permute.xlu0 0
        %548 = vperm.xlu0 %547, %v471
        %v549 = vpop.permute.xlu0 %548
        %550 = vset.pattern.permute.xlu0 0
        %551 = vperm.xlu0 %550, %v472
        %v552 = vpop.permute.xlu0 %551
        %553 = vset.pattern.permute.xlu0 0
        %554 = vperm.xlu0 %553, %v473
        %v555 = vpop.permute.xlu0 %554
        %556 = vset.pattern.permute.xlu0 0
        %557 = vperm.xlu0 %556, %v474
        %v558 = vpop.permute.xlu0 %557
        %559 = vset.pattern.permute.xlu0 0
        %560 = vperm.xlu0 %559, %v475
        %v561 = vpop.permute.xlu0 %560
        %562 = vset.pattern.permute.xlu0 0
        %563 = vperm.xlu0 %562, %v476
        %v564 = vpop.permute.xlu0 %563
        %565 = vset.pattern.permute.xlu0 0
        %566 = vperm.xlu0 %565, %v477
        %v567 = vpop.permute.xlu0 %566
        %568 = vset.pattern.permute.xlu0 0
        %569 = vperm.xlu0 %568, %v478
        %v570 = vpop.permute.xlu0 %569
        %571 = vset.pattern.permute.xlu0 0
        %572 = vperm.xlu0 %571, %v479
        %v573 = vpop.permute.xlu0 %572
        %574 = vset.pattern.permute.xlu0 0
        %575 = vperm.xlu0 %574, %v480
        %v576 = vpop.permute.xlu0 %575
        %577 = vset.pattern.permute.xlu0 0
        %578 = vperm.xlu0 %577, %v481
        %v579 = vpop.permute.xlu0 %578
        %580 = vset.pattern.permute.xlu0 0
        %581 = vperm.xlu0 %580, %v482
        %v582 = vpop.permute.xlu0 %581
        %583 = vset.pattern.permute.xlu0 0
        %584 = vperm.xlu0 %583, %v483
        %v585 = vpop.permute.xlu0 %584
        %586 = vset.pattern.permute.xlu0 0
        %587 = vperm.xlu0 %586, %v484
        %v588 = vpop.permute.xlu0 %587
        %589 = vset.pattern.permute.xlu0 0
        %590 = vperm.xlu0 %589, %v485
        %v591 = vpop.permute.xlu0 %590
        %592 = vset.pattern.permute.xlu0 0
        %593 = vperm.xlu0 %592, %v486
        %v594 = vpop.permute.xlu0 %593
        %595 = vset.pattern.permute.xlu0 0
        %596 = vperm.xlu0 %595, %v487
        %v597 = vpop.permute.xlu0 %596
        %598 = vset.pattern.permute.xlu0 0
        %599 = vperm.xlu0 %598, %v488
        %v600 = vpop.permute.xlu0 %599
        %601 = vset.pattern.permute.xlu0 0
        %602 = vperm.xlu0 %601, %v489
        %v603 = vpop.permute.xlu0 %602
        %604 = vset.pattern.permute.xlu0 0
        %605 = vperm.xlu0 %604, %v490
        %v606 = vpop.permute.xlu0 %605
        %607 = vset.pattern.permute.xlu0 0
        %608 = vperm.xlu0 %607, %v491
        %v609 = vpop.permute.xlu0 %608
        %610 = vset.pattern.permute.xlu0 0
        %611 = vperm.xlu0 %610, %v492
        %v612 = vpop.permute.xlu0 %611
        %613 = vset.pattern.permute.xlu0 0
        %614 = vperm.xlu0 %613, %v493
        %v615 = vpop.permute.xlu0 %614
        %616 = vset.pattern.permute.xlu0 0
        %617 = vperm.xlu0 %616, %v494
        %v618 = vpop.permute.xlu0 %617
        %619 = vset.pattern.permute.xlu0 0
        %620 = vperm.xlu0 %619, %v495
        %v621 = vpop.permute.xlu0 %620
        %622 = vset.pattern.permute.xlu0 0
        %623 = vperm.xlu0 %622, %v496
        %v624 = vpop.permute.xlu0 %623
        %v625 = vlaneseq
        %v626 = vand.u32 %v625, 127
        %v627 = vlaneseq
        %v628 = vshrl.u32 %v627, 7
        %v629 = vsub.s32 %v626, %v628
        %v630 = vrot.slane %v531, %v629
        %v631 = vadd.s32 %v626, 4294967288
        %v632 = vlaneseq
        %v633 = vshrl.u32 %v632, 7
        %v634 = vsub.s32 %v631, %v633
        %v635 = vrot.slane %v534, %v634
        %vm636 = vcmask 130112
        %v637 = vsel %vm636, %v635, %v630
        %v638 = vadd.s32 %v626, 4294967280
        %v639 = vlaneseq
        %v640 = vshrl.u32 %v639, 7
        %v641 = vsub.s32 %v638, %v640
        %v642 = vrot.slane %v537, %v641
        %vm643 = vcmask 195712
        %v644 = vsel %vm643, %v642, %v637
        %v645 = vadd.s32 %v626, 4294967272
        %v646 = vlaneseq
        %v647 = vshrl.u32 %v646, 7
        %v648 = vsub.s32 %v645, %v647
        %v649 = vrot.slane %v540, %v648
        %vm650 = vcmask 261312
        %v651 = vsel %vm650, %v649, %v644
        %v652 = vadd.s32 %v626, 4294967264
        %v653 = vlaneseq
        %v654 = vshrl.u32 %v653, 7
        %v655 = vsub.s32 %v652, %v654
        %v656 = vrot.slane %v543, %v655
        %vm657 = vcmask 326912
        %v658 = vsel %vm657, %v656, %v651
        %v659 = vadd.s32 %v626, 4294967256
        %v660 = vlaneseq
        %v661 = vshrl.u32 %v660, 7
        %v662 = vsub.s32 %v659, %v661
        %v663 = vrot.slane %v546, %v662
        %vm664 = vcmask 392512
        %v665 = vsel %vm664, %v663, %v658
        %v666 = vadd.s32 %v626, 4294967248
        %v667 = vlaneseq
        %v668 = vshrl.u32 %v667, 7
        %v669 = vsub.s32 %v666, %v668
        %v670 = vrot.slane %v549, %v669
        %vm671 = vcmask 458112
        %v672 = vsel %vm671, %v670, %v665
        %v673 = vadd.s32 %v626, 4294967240
        %v674 = vlaneseq
        %v675 = vshrl.u32 %v674, 7
        %v676 = vsub.s32 %v673, %v675
        %v677 = vrot.slane %v552, %v676
        %vm678 = vcmask 523712
        %v679 = vsel %vm678, %v677, %v672
        %v680 = vlaneseq
        %v681 = vshrl.u32 %v680, 7
        %v682 = vsub.s32 %v626, %v681
        %v683 = vrot.slane %v555, %v682
        %v684 = vlaneseq
        %v685 = vshrl.u32 %v684, 7
        %v686 = vsub.s32 %v631, %v685
        %v687 = vrot.slane %v558, %v686
        %v688 = vsel %vm636, %v687, %v683
        %v689 = vlaneseq
        %v690 = vshrl.u32 %v689, 7
        %v691 = vsub.s32 %v638, %v690
        %v692 = vrot.slane %v561, %v691
        %v693 = vsel %vm643, %v692, %v688
        %v694 = vlaneseq
        %v695 = vshrl.u32 %v694, 7
        %v696 = vsub.s32 %v645, %v695
        %v697 = vrot.slane %v564, %v696
        %v698 = vsel %vm650, %v697, %v693
        %v699 = vlaneseq
        %v700 = vshrl.u32 %v699, 7
        %v701 = vsub.s32 %v652, %v700
        %v702 = vrot.slane %v567, %v701
        %v703 = vsel %vm657, %v702, %v698
        %v704 = vlaneseq
        %v705 = vshrl.u32 %v704, 7
        %v706 = vsub.s32 %v659, %v705
        %v707 = vrot.slane %v570, %v706
        %v708 = vsel %vm664, %v707, %v703
        %v709 = vlaneseq
        %v710 = vshrl.u32 %v709, 7
        %v711 = vsub.s32 %v666, %v710
        %v712 = vrot.slane %v573, %v711
        %v713 = vsel %vm671, %v712, %v708
        %v714 = vlaneseq
        %v715 = vshrl.u32 %v714, 7
        %v716 = vsub.s32 %v673, %v715
        %v717 = vrot.slane %v576, %v716
        %v718 = vsel %vm678, %v717, %v713
        %v719 = vlaneseq
        %v720 = vshrl.u32 %v719, 7
        %v721 = vsub.s32 %v626, %v720
        %v722 = vrot.slane %v579, %v721
        %v723 = vlaneseq
        %v724 = vshrl.u32 %v723, 7
        %v725 = vsub.s32 %v631, %v724
        %v726 = vrot.slane %v582, %v725
        %v727 = vsel %vm636, %v726, %v722
        %v728 = vlaneseq
        %v729 = vshrl.u32 %v728, 7
        %v730 = vsub.s32 %v638, %v729
        %v731 = vrot.slane %v585, %v730
        %v732 = vsel %vm643, %v731, %v727
        %v733 = vlaneseq
        %v734 = vshrl.u32 %v733, 7
        %v735 = vsub.s32 %v645, %v734
        %v736 = vrot.slane %v588, %v735
        %v737 = vsel %vm650, %v736, %v732
        %v738 = vlaneseq
        %v739 = vshrl.u32 %v738, 7
        %v740 = vsub.s32 %v652, %v739
        %v741 = vrot.slane %v591, %v740
        %v742 = vsel %vm657, %v741, %v737
        %v743 = vlaneseq
        %v744 = vshrl.u32 %v743, 7
        %v745 = vsub.s32 %v659, %v744
        %v746 = vrot.slane %v594, %v745
        %v747 = vsel %vm664, %v746, %v742
        %v748 = vlaneseq
        %v749 = vshrl.u32 %v748, 7
        %v750 = vsub.s32 %v666, %v749
        %v751 = vrot.slane %v597, %v750
        %v752 = vsel %vm671, %v751, %v747
        %v753 = vlaneseq
        %v754 = vshrl.u32 %v753, 7
        %v755 = vsub.s32 %v673, %v754
        %v756 = vrot.slane %v600, %v755
        %v757 = vsel %vm678, %v756, %v752
        %v758 = vlaneseq
        %v759 = vshrl.u32 %v758, 7
        %v760 = vsub.s32 %v626, %v759
        %v761 = vrot.slane %v603, %v760
        %v762 = vlaneseq
        %v763 = vshrl.u32 %v762, 7
        %v764 = vsub.s32 %v631, %v763
        %v765 = vrot.slane %v606, %v764
        %v766 = vsel %vm636, %v765, %v761
        %v767 = vlaneseq
        %v768 = vshrl.u32 %v767, 7
        %v769 = vsub.s32 %v638, %v768
        %v770 = vrot.slane %v609, %v769
        %v771 = vsel %vm643, %v770, %v766
        %v772 = vlaneseq
        %v773 = vshrl.u32 %v772, 7
        %v774 = vsub.s32 %v645, %v773
        %v775 = vrot.slane %v612, %v774
        %v776 = vsel %vm650, %v775, %v771
        %v777 = vlaneseq
        %v778 = vshrl.u32 %v777, 7
        %v779 = vsub.s32 %v652, %v778
        %v780 = vrot.slane %v615, %v779
        %v781 = vsel %vm657, %v780, %v776
        %v782 = vlaneseq
        %v783 = vshrl.u32 %v782, 7
        %v784 = vsub.s32 %v659, %v783
        %v785 = vrot.slane %v618, %v784
        %v786 = vsel %vm664, %v785, %v781
        %v787 = vlaneseq
        %v788 = vshrl.u32 %v787, 7
        %v789 = vsub.s32 %v666, %v788
        %v790 = vrot.slane %v621, %v789
        %v791 = vsel %vm671, %v790, %v786
        %v792 = vlaneseq
        %v793 = vshrl.u32 %v792, 7
        %v794 = vsub.s32 %v673, %v793
        %v795 = vrot.slane %v624, %v794
        %v796 = vsel %vm678, %v795, %v791
        %vm797 = vcmask 1041409
        %v798 = vsel %vm797, %v718, %v679
        %vm799 = vcmask 1042434
        %v800 = vsel %vm799, %v757, %v798
        %vm801 = vcmask 1043459
        %v802 = vsel %vm801, %v796, %v800
        %vm804 = vcmask 519168
        %v805 = vsel %vm804, %v802, 0.0
        %806 = vadd.xlane.f32.xlu0 %v805
        %v807 = vpop.xlane.xlu0 %806
        %v808 = vld [vmem:[%s2] sm:$0x1]
        %v810 = vlaneseq
        %v811 = vshrl.u32 %v810, 7
        %v812 = vsub.s32 0, %v811
        %v813 = vrot.slane %v808, %v812
        %815 = vbcast.lane.b32.xlu0 %v813, 256
        %v816 = vpop.permute.xlu0 %815
        %v818 = vadd.f32 %v807, %v816
        %v819 = vmax.f32 %v818, 0.0
        %v820 = vld [vmem:[%s3] sm:$0xff]
        %v821 = vld [vmem:[%s3 + $0x8] sm:$0xff]
        %v822 = vld [vmem:[%s3 + $0x10] sm:$0xff]
        %v823 = vld [vmem:[%s3 + $0x18] sm:$0xff]
        %v824 = vld [vmem:[%s3 + $0x20] sm:$0xff]
        %v825 = vld [vmem:[%s3 + $0x28] sm:$0xff]
        %v826 = vld [vmem:[%s3 + $0x30] sm:$0xff]
        %v827 = vld [vmem:[%s3 + $0x38] sm:$0xff]
        %v836 = vlaneseq
        %v837 = vshrl.u32 %v836, 7
        %v838 = vsub.s32 0, %v837
        %v839 = vrot.slane %v820, %v838
        %841 = vbcast.lane.b32.xlu0 %v839, 256
        %v842 = vpop.permute.xlu0 %841
        %v843 = vlaneseq
        %v844 = vshrl.u32 %v843, 7
        %v845 = vsub.s32 1, %v844
        %v846 = vrot.slane %v820, %v845
        %848 = vbcast.lane.b32.xlu0 %v846, 256
        %v849 = vpop.permute.xlu0 %848
        %v850 = vlaneseq
        %v851 = vshrl.u32 %v850, 7
        %v852 = vsub.s32 2, %v851
        %v853 = vrot.slane %v820, %v852
        %855 = vbcast.lane.b32.xlu0 %v853, 256
        %v856 = vpop.permute.xlu0 %855
        %v857 = vlaneseq
        %v858 = vshrl.u32 %v857, 7
        %v859 = vsub.s32 3, %v858
        %v860 = vrot.slane %v820, %v859
        %862 = vbcast.lane.b32.xlu0 %v860, 256
        %v863 = vpop.permute.xlu0 %862
        %v864 = vlaneseq
        %v865 = vshrl.u32 %v864, 7
        %v866 = vsub.s32 4, %v865
        %v867 = vrot.slane %v820, %v866
        %869 = vbcast.lane.b32.xlu0 %v867, 256
        %v870 = vpop.permute.xlu0 %869
        %v871 = vlaneseq
        %v872 = vshrl.u32 %v871, 7
        %v873 = vsub.s32 5, %v872
        %v874 = vrot.slane %v820, %v873
        %876 = vbcast.lane.b32.xlu0 %v874, 256
        %v877 = vpop.permute.xlu0 %876
        %v878 = vlaneseq
        %v879 = vshrl.u32 %v878, 7
        %v880 = vsub.s32 6, %v879
        %v881 = vrot.slane %v820, %v880
        %883 = vbcast.lane.b32.xlu0 %v881, 256
        %v884 = vpop.permute.xlu0 %883
        %v885 = vlaneseq
        %v886 = vshrl.u32 %v885, 7
        %v887 = vsub.s32 7, %v886
        %v888 = vrot.slane %v820, %v887
        %890 = vbcast.lane.b32.xlu0 %v888, 256
        %v891 = vpop.permute.xlu0 %890
        %v892 = vlaneseq
        %v893 = vshrl.u32 %v892, 7
        %v894 = vsub.s32 0, %v893
        %v895 = vrot.slane %v821, %v894
        %897 = vbcast.lane.b32.xlu0 %v895, 256
        %v898 = vpop.permute.xlu0 %897
        %v899 = vlaneseq
        %v900 = vshrl.u32 %v899, 7
        %v901 = vsub.s32 1, %v900
        %v902 = vrot.slane %v821, %v901
        %904 = vbcast.lane.b32.xlu0 %v902, 256
        %v905 = vpop.permute.xlu0 %904
        %v906 = vlaneseq
        %v907 = vshrl.u32 %v906, 7
        %v908 = vsub.s32 2, %v907
        %v909 = vrot.slane %v821, %v908
        %911 = vbcast.lane.b32.xlu0 %v909, 256
        %v912 = vpop.permute.xlu0 %911
        %v913 = vlaneseq
        %v914 = vshrl.u32 %v913, 7
        %v915 = vsub.s32 3, %v914
        %v916 = vrot.slane %v821, %v915
        %918 = vbcast.lane.b32.xlu0 %v916, 256
        %v919 = vpop.permute.xlu0 %918
        %v920 = vlaneseq
        %v921 = vshrl.u32 %v920, 7
        %v922 = vsub.s32 4, %v921
        %v923 = vrot.slane %v821, %v922
        %925 = vbcast.lane.b32.xlu0 %v923, 256
        %v926 = vpop.permute.xlu0 %925
        %v927 = vlaneseq
        %v928 = vshrl.u32 %v927, 7
        %v929 = vsub.s32 5, %v928
        %v930 = vrot.slane %v821, %v929
        %932 = vbcast.lane.b32.xlu0 %v930, 256
        %v933 = vpop.permute.xlu0 %932
        %v934 = vlaneseq
        %v935 = vshrl.u32 %v934, 7
        %v936 = vsub.s32 6, %v935
        %v937 = vrot.slane %v821, %v936
        %939 = vbcast.lane.b32.xlu0 %v937, 256
        %v940 = vpop.permute.xlu0 %939
        %v941 = vlaneseq
        %v942 = vshrl.u32 %v941, 7
        %v943 = vsub.s32 7, %v942
        %v944 = vrot.slane %v821, %v943
        %946 = vbcast.lane.b32.xlu0 %v944, 256
        %v947 = vpop.permute.xlu0 %946
        %v948 = vlaneseq
        %v949 = vshrl.u32 %v948, 7
        %v950 = vsub.s32 0, %v949
        %v951 = vrot.slane %v822, %v950
        %953 = vbcast.lane.b32.xlu0 %v951, 256
        %v954 = vpop.permute.xlu0 %953
        %v955 = vlaneseq
        %v956 = vshrl.u32 %v955, 7
        %v957 = vsub.s32 1, %v956
        %v958 = vrot.slane %v822, %v957
        %960 = vbcast.lane.b32.xlu0 %v958, 256
        %v961 = vpop.permute.xlu0 %960
        %v962 = vlaneseq
        %v963 = vshrl.u32 %v962, 7
        %v964 = vsub.s32 2, %v963
        %v965 = vrot.slane %v822, %v964
        %967 = vbcast.lane.b32.xlu0 %v965, 256
        %v968 = vpop.permute.xlu0 %967
        %v969 = vlaneseq
        %v970 = vshrl.u32 %v969, 7
        %v971 = vsub.s32 3, %v970
        %v972 = vrot.slane %v822, %v971
        %974 = vbcast.lane.b32.xlu0 %v972, 256
        %v975 = vpop.permute.xlu0 %974
        %v976 = vlaneseq
        %v977 = vshrl.u32 %v976, 7
        %v978 = vsub.s32 4, %v977
        %v979 = vrot.slane %v822, %v978
        %981 = vbcast.lane.b32.xlu0 %v979, 256
        %v982 = vpop.permute.xlu0 %981
        %v983 = vlaneseq
        %v984 = vshrl.u32 %v983, 7
        %v985 = vsub.s32 5, %v984
        %v986 = vrot.slane %v822, %v985
        %988 = vbcast.lane.b32.xlu0 %v986, 256
        %v989 = vpop.permute.xlu0 %988
        %v990 = vlaneseq
        %v991 = vshrl.u32 %v990, 7
        %v992 = vsub.s32 6, %v991
        %v993 = vrot.slane %v822, %v992
        %995 = vbcast.lane.b32.xlu0 %v993, 256
        %v996 = vpop.permute.xlu0 %995
        %v997 = vlaneseq
        %v998 = vshrl.u32 %v997, 7
        %v999 = vsub.s32 7, %v998
        %v1000 = vrot.slane %v822, %v999
        %1002 = vbcast.lane.b32.xlu0 %v1000, 256
        %v1003 = vpop.permute.xlu0 %1002
        %v1004 = vlaneseq
        %v1005 = vshrl.u32 %v1004, 7
        %v1006 = vsub.s32 0, %v1005
        %v1007 = vrot.slane %v823, %v1006
        %1009 = vbcast.lane.b32.xlu0 %v1007, 256
        %v1010 = vpop.permute.xlu0 %1009
        %v1011 = vlaneseq
        %v1012 = vshrl.u32 %v1011, 7
        %v1013 = vsub.s32 1, %v1012
        %v1014 = vrot.slane %v823, %v1013
        %1016 = vbcast.lane.b32.xlu0 %v1014, 256
        %v1017 = vpop.permute.xlu0 %1016
        %v1018 = vlaneseq
        %v1019 = vshrl.u32 %v1018, 7
        %v1020 = vsub.s32 2, %v1019
        %v1021 = vrot.slane %v823, %v1020
        %1023 = vbcast.lane.b32.xlu0 %v1021, 256
        %v1024 = vpop.permute.xlu0 %1023
        %v1025 = vlaneseq
        %v1026 = vshrl.u32 %v1025, 7
        %v1027 = vsub.s32 3, %v1026
        %v1028 = vrot.slane %v823, %v1027
        %1030 = vbcast.lane.b32.xlu0 %v1028, 256
        %v1031 = vpop.permute.xlu0 %1030
        %v1032 = vlaneseq
        %v1033 = vshrl.u32 %v1032, 7
        %v1034 = vsub.s32 4, %v1033
        %v1035 = vrot.slane %v823, %v1034
        %1037 = vbcast.lane.b32.xlu0 %v1035, 256
        %v1038 = vpop.permute.xlu0 %1037
        %v1039 = vlaneseq
        %v1040 = vshrl.u32 %v1039, 7
        %v1041 = vsub.s32 5, %v1040
        %v1042 = vrot.slane %v823, %v1041
        %1044 = vbcast.lane.b32.xlu0 %v1042, 256
        %v1045 = vpop.permute.xlu0 %1044
        %v1046 = vlaneseq
        %v1047 = vshrl.u32 %v1046, 7
        %v1048 = vsub.s32 6, %v1047
        %v1049 = vrot.slane %v823, %v1048
        %1051 = vbcast.lane.b32.xlu0 %v1049, 256
        %v1052 = vpop.permute.xlu0 %1051
        %v1053 = vlaneseq
        %v1054 = vshrl.u32 %v1053, 7
        %v1055 = vsub.s32 7, %v1054
        %v1056 = vrot.slane %v823, %v1055
        %1058 = vbcast.lane.b32.xlu0 %v1056, 256
        %v1059 = vpop.permute.xlu0 %1058
        %v1060 = vlaneseq
        %v1061 = vshrl.u32 %v1060, 7
        %v1062 = vsub.s32 0, %v1061
        %v1063 = vrot.slane %v824, %v1062
        %1065 = vbcast.lane.b32.xlu0 %v1063, 256
        %v1066 = vpop.permute.xlu0 %1065
        %v1067 = vlaneseq
        %v1068 = vshrl.u32 %v1067, 7
        %v1069 = vsub.s32 1, %v1068
        %v1070 = vrot.slane %v824, %v1069
        %1072 = vbcast.lane.b32.xlu0 %v1070, 256
        %v1073 = vpop.permute.xlu0 %1072
        %v1074 = vlaneseq
        %v1075 = vshrl.u32 %v1074, 7
        %v1076 = vsub.s32 2, %v1075
        %v1077 = vrot.slane %v824, %v1076
        %1079 = vbcast.lane.b32.xlu0 %v1077, 256
        %v1080 = vpop.permute.xlu0 %1079
        %v1081 = vlaneseq
        %v1082 = vshrl.u32 %v1081, 7
        %v1083 = vsub.s32 3, %v1082
        %v1084 = vrot.slane %v824, %v1083
        %1086 = vbcast.lane.b32.xlu0 %v1084, 256
        %v1087 = vpop.permute.xlu0 %1086
        %v1088 = vlaneseq
        %v1089 = vshrl.u32 %v1088, 7
        %v1090 = vsub.s32 4, %v1089
        %v1091 = vrot.slane %v824, %v1090
        %1093 = vbcast.lane.b32.xlu0 %v1091, 256
        %v1094 = vpop.permute.xlu0 %1093
        %v1095 = vlaneseq
        %v1096 = vshrl.u32 %v1095, 7
        %v1097 = vsub.s32 5, %v1096
        %v1098 = vrot.slane %v824, %v1097
        %1100 = vbcast.lane.b32.xlu0 %v1098, 256
        %v1101 = vpop.permute.xlu0 %1100
        %v1102 = vlaneseq
        %v1103 = vshrl.u32 %v1102, 7
        %v1104 = vsub.s32 6, %v1103
        %v1105 = vrot.slane %v824, %v1104
        %1107 = vbcast.lane.b32.xlu0 %v1105, 256
        %v1108 = vpop.permute.xlu0 %1107
        %v1109 = vlaneseq
        %v1110 = vshrl.u32 %v1109, 7
        %v1111 = vsub.s32 7, %v1110
        %v1112 = vrot.slane %v824, %v1111
        %1114 = vbcast.lane.b32.xlu0 %v1112, 256
        %v1115 = vpop.permute.xlu0 %1114
        %v1116 = vlaneseq
        %v1117 = vshrl.u32 %v1116, 7
        %v1118 = vsub.s32 0, %v1117
        %v1119 = vrot.slane %v825, %v1118
        %1121 = vbcast.lane.b32.xlu0 %v1119, 256
        %v1122 = vpop.permute.xlu0 %1121
        %v1123 = vlaneseq
        %v1124 = vshrl.u32 %v1123, 7
        %v1125 = vsub.s32 1, %v1124
        %v1126 = vrot.slane %v825, %v1125
        %1128 = vbcast.lane.b32.xlu0 %v1126, 256
        %v1129 = vpop.permute.xlu0 %1128
        %v1130 = vlaneseq
        %v1131 = vshrl.u32 %v1130, 7
        %v1132 = vsub.s32 2, %v1131
        %v1133 = vrot.slane %v825, %v1132
        %1135 = vbcast.lane.b32.xlu0 %v1133, 256
        %v1136 = vpop.permute.xlu0 %1135
        %v1137 = vlaneseq
        %v1138 = vshrl.u32 %v1137, 7
        %v1139 = vsub.s32 3, %v1138
        %v1140 = vrot.slane %v825, %v1139
        %1142 = vbcast.lane.b32.xlu0 %v1140, 256
        %v1143 = vpop.permute.xlu0 %1142
        %v1144 = vlaneseq
        %v1145 = vshrl.u32 %v1144, 7
        %v1146 = vsub.s32 4, %v1145
        %v1147 = vrot.slane %v825, %v1146
        %1149 = vbcast.lane.b32.xlu0 %v1147, 256
        %v1150 = vpop.permute.xlu0 %1149
        %v1151 = vlaneseq
        %v1152 = vshrl.u32 %v1151, 7
        %v1153 = vsub.s32 5, %v1152
        %v1154 = vrot.slane %v825, %v1153
        %1156 = vbcast.lane.b32.xlu0 %v1154, 256
        %v1157 = vpop.permute.xlu0 %1156
        %v1158 = vlaneseq
        %v1159 = vshrl.u32 %v1158, 7
        %v1160 = vsub.s32 6, %v1159
        %v1161 = vrot.slane %v825, %v1160
        %1163 = vbcast.lane.b32.xlu0 %v1161, 256
        %v1164 = vpop.permute.xlu0 %1163
        %v1165 = vlaneseq
        %v1166 = vshrl.u32 %v1165, 7
        %v1167 = vsub.s32 7, %v1166
        %v1168 = vrot.slane %v825, %v1167
        %1170 = vbcast.lane.b32.xlu0 %v1168, 256
        %v1171 = vpop.permute.xlu0 %1170
        %v1172 = vlaneseq
        %v1173 = vshrl.u32 %v1172, 7
        %v1174 = vsub.s32 0, %v1173
        %v1175 = vrot.slane %v826, %v1174
        %1177 = vbcast.lane.b32.xlu0 %v1175, 256
        %v1178 = vpop.permute.xlu0 %1177
        %v1179 = vlaneseq
        %v1180 = vshrl.u32 %v1179, 7
        %v1181 = vsub.s32 1, %v1180
        %v1182 = vrot.slane %v826, %v1181
        %1184 = vbcast.lane.b32.xlu0 %v1182, 256
        %v1185 = vpop.permute.xlu0 %1184
        %v1186 = vlaneseq
        %v1187 = vshrl.u32 %v1186, 7
        %v1188 = vsub.s32 2, %v1187
        %v1189 = vrot.slane %v826, %v1188
        %1191 = vbcast.lane.b32.xlu0 %v1189, 256
        %v1192 = vpop.permute.xlu0 %1191
        %v1193 = vlaneseq
        %v1194 = vshrl.u32 %v1193, 7
        %v1195 = vsub.s32 3, %v1194
        %v1196 = vrot.slane %v826, %v1195
        %1198 = vbcast.lane.b32.xlu0 %v1196, 256
        %v1199 = vpop.permute.xlu0 %1198
        %v1200 = vlaneseq
        %v1201 = vshrl.u32 %v1200, 7
        %v1202 = vsub.s32 4, %v1201
        %v1203 = vrot.slane %v826, %v1202
        %1205 = vbcast.lane.b32.xlu0 %v1203, 256
        %v1206 = vpop.permute.xlu0 %1205
        %v1207 = vlaneseq
        %v1208 = vshrl.u32 %v1207, 7
        %v1209 = vsub.s32 5, %v1208
        %v1210 = vrot.slane %v826, %v1209
        %1212 = vbcast.lane.b32.xlu0 %v1210, 256
        %v1213 = vpop.permute.xlu0 %1212
        %v1214 = vlaneseq
        %v1215 = vshrl.u32 %v1214, 7
        %v1216 = vsub.s32 6, %v1215
        %v1217 = vrot.slane %v826, %v1216
        %1219 = vbcast.lane.b32.xlu0 %v1217, 256
        %v1220 = vpop.permute.xlu0 %1219
        %v1221 = vlaneseq
        %v1222 = vshrl.u32 %v1221, 7
        %v1223 = vsub.s32 7, %v1222
        %v1224 = vrot.slane %v826, %v1223
        %1226 = vbcast.lane.b32.xlu0 %v1224, 256
        %v1227 = vpop.permute.xlu0 %1226
        %v1228 = vlaneseq
        %v1229 = vshrl.u32 %v1228, 7
        %v1230 = vsub.s32 0, %v1229
        %v1231 = vrot.slane %v827, %v1230
        %1233 = vbcast.lane.b32.xlu0 %v1231, 256
        %v1234 = vpop.permute.xlu0 %1233
        %v1235 = vlaneseq
        %v1236 = vshrl.u32 %v1235, 7
        %v1237 = vsub.s32 1, %v1236
        %v1238 = vrot.slane %v827, %v1237
        %1240 = vbcast.lane.b32.xlu0 %v1238, 256
        %v1241 = vpop.permute.xlu0 %1240
        %v1242 = vlaneseq
        %v1243 = vshrl.u32 %v1242, 7
        %v1244 = vsub.s32 2, %v1243
        %v1245 = vrot.slane %v827, %v1244
        %1247 = vbcast.lane.b32.xlu0 %v1245, 256
        %v1248 = vpop.permute.xlu0 %1247
        %v1249 = vlaneseq
        %v1250 = vshrl.u32 %v1249, 7
        %v1251 = vsub.s32 3, %v1250
        %v1252 = vrot.slane %v827, %v1251
        %1254 = vbcast.lane.b32.xlu0 %v1252, 256
        %v1255 = vpop.permute.xlu0 %1254
        %v1256 = vlaneseq
        %v1257 = vshrl.u32 %v1256, 7
        %v1258 = vsub.s32 4, %v1257
        %v1259 = vrot.slane %v827, %v1258
        %1261 = vbcast.lane.b32.xlu0 %v1259, 256
        %v1262 = vpop.permute.xlu0 %1261
        %v1263 = vlaneseq
        %v1264 = vshrl.u32 %v1263, 7
        %v1265 = vsub.s32 5, %v1264
        %v1266 = vrot.slane %v827, %v1265
        %1268 = vbcast.lane.b32.xlu0 %v1266, 256
        %v1269 = vpop.permute.xlu0 %1268
        %v1270 = vlaneseq
        %v1271 = vshrl.u32 %v1270, 7
        %v1272 = vsub.s32 6, %v1271
        %v1273 = vrot.slane %v827, %v1272
        %1275 = vbcast.lane.b32.xlu0 %v1273, 256
        %v1276 = vpop.permute.xlu0 %1275
        %v1277 = vlaneseq
        %v1278 = vshrl.u32 %v1277, 7
        %v1279 = vsub.s32 7, %v1278
        %v1280 = vrot.slane %v827, %v1279
        %1282 = vbcast.lane.b32.xlu0 %v1280, 256
        %v1283 = vpop.permute.xlu0 %1282
        %v1348 = vmul.f32 %v819, %v842
        %v1349 = vmul.f32 %v819, %v849
        %v1350 = vmul.f32 %v819, %v856
        %v1351 = vmul.f32 %v819, %v863
        %v1352 = vmul.f32 %v819, %v870
        %v1353 = vmul.f32 %v819, %v877
        %v1354 = vmul.f32 %v819, %v884
        %v1355 = vmul.f32 %v819, %v891
        %v1356 = vmul.f32 %v819, %v898
        %v1357 = vmul.f32 %v819, %v905
        %v1358 = vmul.f32 %v819, %v912
        %v1359 = vmul.f32 %v819, %v919
        %v1360 = vmul.f32 %v819, %v926
        %v1361 = vmul.f32 %v819, %v933
        %v1362 = vmul.f32 %v819, %v940
        %v1363 = vmul.f32 %v819, %v947
        %v1364 = vmul.f32 %v819, %v954
        %v1365 = vmul.f32 %v819, %v961
        %v1366 = vmul.f32 %v819, %v968
        %v1367 = vmul.f32 %v819, %v975
        %v1368 = vmul.f32 %v819, %v982
        %v1369 = vmul.f32 %v819, %v989
        %v1370 = vmul.f32 %v819, %v996
        %v1371 = vmul.f32 %v819, %v1003
        %v1372 = vmul.f32 %v819, %v1010
        %v1373 = vmul.f32 %v819, %v1017
        %v1374 = vmul.f32 %v819, %v1024
        %v1375 = vmul.f32 %v819, %v1031
        %v1376 = vmul.f32 %v819, %v1038
        %v1377 = vmul.f32 %v819, %v1045
        %v1378 = vmul.f32 %v819, %v1052
        %v1379 = vmul.f32 %v819, %v1059
        %v1380 = vmul.f32 %v819, %v1066
        %v1381 = vmul.f32 %v819, %v1073
        %v1382 = vmul.f32 %v819, %v1080
        %v1383 = vmul.f32 %v819, %v1087
        %v1384 = vmul.f32 %v819, %v1094
        %v1385 = vmul.f32 %v819, %v1101
        %v1386 = vmul.f32 %v819, %v1108
        %v1387 = vmul.f32 %v819, %v1115
        %v1388 = vmul.f32 %v819, %v1122
        %v1389 = vmul.f32 %v819, %v1129
        %v1390 = vmul.f32 %v819, %v1136
        %v1391 = vmul.f32 %v819, %v1143
        %v1392 = vmul.f32 %v819, %v1150
        %v1393 = vmul.f32 %v819, %v1157
        %v1394 = vmul.f32 %v819, %v1164
        %v1395 = vmul.f32 %v819, %v1171
        %v1396 = vmul.f32 %v819, %v1178
        %v1397 = vmul.f32 %v819, %v1185
        %v1398 = vmul.f32 %v819, %v1192
        %v1399 = vmul.f32 %v819, %v1199
        %v1400 = vmul.f32 %v819, %v1206
        %v1401 = vmul.f32 %v819, %v1213
        %v1402 = vmul.f32 %v819, %v1220
        %v1403 = vmul.f32 %v819, %v1227
        %v1404 = vmul.f32 %v819, %v1234
        %v1405 = vmul.f32 %v819, %v1241
        %v1406 = vmul.f32 %v819, %v1248
        %v1407 = vmul.f32 %v819, %v1255
        %v1408 = vmul.f32 %v819, %v1262
        %v1409 = vmul.f32 %v819, %v1269
        %v1410 = vmul.f32 %v819, %v1276
        %v1411 = vmul.f32 %v819, %v1283
        %1476 = vset.pattern.permute.xlu0 0
        %1477 = vperm.xlu0 %1476, %v1348
        %v1478 = vpop.permute.xlu0 %1477
        %1479 = vset.pattern.permute.xlu0 0
        %1480 = vperm.xlu0 %1479, %v1349
        %v1481 = vpop.permute.xlu0 %1480
        %1482 = vset.pattern.permute.xlu0 0
        %1483 = vperm.xlu0 %1482, %v1350
        %v1484 = vpop.permute.xlu0 %1483
        %1485 = vset.pattern.permute.xlu0 0
        %1486 = vperm.xlu0 %1485, %v1351
        %v1487 = vpop.permute.xlu0 %1486
        %1488 = vset.pattern.permute.xlu0 0
        %1489 = vperm.xlu0 %1488, %v1352
        %v1490 = vpop.permute.xlu0 %1489
        %1491 = vset.pattern.permute.xlu0 0
        %1492 = vperm.xlu0 %1491, %v1353
        %v1493 = vpop.permute.xlu0 %1492
        %1494 = vset.pattern.permute.xlu0 0
        %1495 = vperm.xlu0 %1494, %v1354
        %v1496 = vpop.permute.xlu0 %1495
        %1497 = vset.pattern.permute.xlu0 0
        %1498 = vperm.xlu0 %1497, %v1355
        %v1499 = vpop.permute.xlu0 %1498
        %1500 = vset.pattern.permute.xlu0 0
        %1501 = vperm.xlu0 %1500, %v1356
        %v1502 = vpop.permute.xlu0 %1501
        %1503 = vset.pattern.permute.xlu0 0
        %1504 = vperm.xlu0 %1503, %v1357
        %v1505 = vpop.permute.xlu0 %1504
        %1506 = vset.pattern.permute.xlu0 0
        %1507 = vperm.xlu0 %1506, %v1358
        %v1508 = vpop.permute.xlu0 %1507
        %1509 = vset.pattern.permute.xlu0 0
        %1510 = vperm.xlu0 %1509, %v1359
        %v1511 = vpop.permute.xlu0 %1510
        %1512 = vset.pattern.permute.xlu0 0
        %1513 = vperm.xlu0 %1512, %v1360
        %v1514 = vpop.permute.xlu0 %1513
        %1515 = vset.pattern.permute.xlu0 0
        %1516 = vperm.xlu0 %1515, %v1361
        %v1517 = vpop.permute.xlu0 %1516
        %1518 = vset.pattern.permute.xlu0 0
        %1519 = vperm.xlu0 %1518, %v1362
        %v1520 = vpop.permute.xlu0 %1519
        %1521 = vset.pattern.permute.xlu0 0
        %1522 = vperm.xlu0 %1521, %v1363
        %v1523 = vpop.permute.xlu0 %1522
        %1524 = vset.pattern.permute.xlu0 0
        %1525 = vperm.xlu0 %1524, %v1364
        %v1526 = vpop.permute.xlu0 %1525
        %1527 = vset.pattern.permute.xlu0 0
        %1528 = vperm.xlu0 %1527, %v1365
        %v1529 = vpop.permute.xlu0 %1528
        %1530 = vset.pattern.permute.xlu0 0
        %1531 = vperm.xlu0 %1530, %v1366
        %v1532 = vpop.permute.xlu0 %1531
        %1533 = vset.pattern.permute.xlu0 0
        %1534 = vperm.xlu0 %1533, %v1367
        %v1535 = vpop.permute.xlu0 %1534
        %1536 = vset.pattern.permute.xlu0 0
        %1537 = vperm.xlu0 %1536, %v1368
        %v1538 = vpop.permute.xlu0 %1537
        %1539 = vset.pattern.permute.xlu0 0
        %1540 = vperm.xlu0 %1539, %v1369
        %v1541 = vpop.permute.xlu0 %1540
        %1542 = vset.pattern.permute.xlu0 0
        %1543 = vperm.xlu0 %1542, %v1370
        %v1544 = vpop.permute.xlu0 %1543
        %1545 = vset.pattern.permute.xlu0 0
        %1546 = vperm.xlu0 %1545, %v1371
        %v1547 = vpop.permute.xlu0 %1546
        %1548 = vset.pattern.permute.xlu0 0
        %1549 = vperm.xlu0 %1548, %v1372
        %v1550 = vpop.permute.xlu0 %1549
        %1551 = vset.pattern.permute.xlu0 0
        %1552 = vperm.xlu0 %1551, %v1373
        %v1553 = vpop.permute.xlu0 %1552
        %1554 = vset.pattern.permute.xlu0 0
        %1555 = vperm.xlu0 %1554, %v1374
        %v1556 = vpop.permute.xlu0 %1555
        %1557 = vset.pattern.permute.xlu0 0
        %1558 = vperm.xlu0 %1557, %v1375
        %v1559 = vpop.permute.xlu0 %1558
        %1560 = vset.pattern.permute.xlu0 0
        %1561 = vperm.xlu0 %1560, %v1376
        %v1562 = vpop.permute.xlu0 %1561
        %1563 = vset.pattern.permute.xlu0 0
        %1564 = vperm.xlu0 %1563, %v1377
        %v1565 = vpop.permute.xlu0 %1564
        %1566 = vset.pattern.permute.xlu0 0
        %1567 = vperm.xlu0 %1566, %v1378
        %v1568 = vpop.permute.xlu0 %1567
        %1569 = vset.pattern.permute.xlu0 0
        %1570 = vperm.xlu0 %1569, %v1379
        %v1571 = vpop.permute.xlu0 %1570
        %1572 = vset.pattern.permute.xlu0 0
        %1573 = vperm.xlu0 %1572, %v1380
        %v1574 = vpop.permute.xlu0 %1573
        %1575 = vset.pattern.permute.xlu0 0
        %1576 = vperm.xlu0 %1575, %v1381
        %v1577 = vpop.permute.xlu0 %1576
        %1578 = vset.pattern.permute.xlu0 0
        %1579 = vperm.xlu0 %1578, %v1382
        %v1580 = vpop.permute.xlu0 %1579
        %1581 = vset.pattern.permute.xlu0 0
        %1582 = vperm.xlu0 %1581, %v1383
        %v1583 = vpop.permute.xlu0 %1582
        %1584 = vset.pattern.permute.xlu0 0
        %1585 = vperm.xlu0 %1584, %v1384
        %v1586 = vpop.permute.xlu0 %1585
        %1587 = vset.pattern.permute.xlu0 0
        %1588 = vperm.xlu0 %1587, %v1385
        %v1589 = vpop.permute.xlu0 %1588
        %1590 = vset.pattern.permute.xlu0 0
        %1591 = vperm.xlu0 %1590, %v1386
        %v1592 = vpop.permute.xlu0 %1591
        %1593 = vset.pattern.permute.xlu0 0
        %1594 = vperm.xlu0 %1593, %v1387
        %v1595 = vpop.permute.xlu0 %1594
        %1596 = vset.pattern.permute.xlu0 0
        %1597 = vperm.xlu0 %1596, %v1388
        %v1598 = vpop.permute.xlu0 %1597
        %1599 = vset.pattern.permute.xlu0 0
        %1600 = vperm.xlu0 %1599, %v1389
        %v1601 = vpop.permute.xlu0 %1600
        %1602 = vset.pattern.permute.xlu0 0
        %1603 = vperm.xlu0 %1602, %v1390
        %v1604 = vpop.permute.xlu0 %1603
        %1605 = vset.pattern.permute.xlu0 0
        %1606 = vperm.xlu0 %1605, %v1391
        %v1607 = vpop.permute.xlu0 %1606
        %1608 = vset.pattern.permute.xlu0 0
        %1609 = vperm.xlu0 %1608, %v1392
        %v1610 = vpop.permute.xlu0 %1609
        %1611 = vset.pattern.permute.xlu0 0
        %1612 = vperm.xlu0 %1611, %v1393
        %v1613 = vpop.permute.xlu0 %1612
        %1614 = vset.pattern.permute.xlu0 0
        %1615 = vperm.xlu0 %1614, %v1394
        %v1616 = vpop.permute.xlu0 %1615
        %1617 = vset.pattern.permute.xlu0 0
        %1618 = vperm.xlu0 %1617, %v1395
        %v1619 = vpop.permute.xlu0 %1618
        %1620 = vset.pattern.permute.xlu0 0
        %1621 = vperm.xlu0 %1620, %v1396
        %v1622 = vpop.permute.xlu0 %1621
        %1623 = vset.pattern.permute.xlu0 0
        %1624 = vperm.xlu0 %1623, %v1397
        %v1625 = vpop.permute.xlu0 %1624
        %1626 = vset.pattern.permute.xlu0 0
        %1627 = vperm.xlu0 %1626, %v1398
        %v1628 = vpop.permute.xlu0 %1627
        %1629 = vset.pattern.permute.xlu0 0
        %1630 = vperm.xlu0 %1629, %v1399
        %v1631 = vpop.permute.xlu0 %1630
        %1632 = vset.pattern.permute.xlu0 0
        %1633 = vperm.xlu0 %1632, %v1400
        %v1634 = vpop.permute.xlu0 %1633
        %1635 = vset.pattern.permute.xlu0 0
        %1636 = vperm.xlu0 %1635, %v1401
        %v1637 = vpop.permute.xlu0 %1636
        %1638 = vset.pattern.permute.xlu0 0
        %1639 = vperm.xlu0 %1638, %v1402
        %v1640 = vpop.permute.xlu0 %1639
        %1641 = vset.pattern.permute.xlu0 0
        %1642 = vperm.xlu0 %1641, %v1403
        %v1643 = vpop.permute.xlu0 %1642
        %1644 = vset.pattern.permute.xlu0 0
        %1645 = vperm.xlu0 %1644, %v1404
        %v1646 = vpop.permute.xlu0 %1645
        %1647 = vset.pattern.permute.xlu0 0
        %1648 = vperm.xlu0 %1647, %v1405
        %v1649 = vpop.permute.xlu0 %1648
        %1650 = vset.pattern.permute.xlu0 0
        %1651 = vperm.xlu0 %1650, %v1406
        %v1652 = vpop.permute.xlu0 %1651
        %1653 = vset.pattern.permute.xlu0 0
        %1654 = vperm.xlu0 %1653, %v1407
        %v1655 = vpop.permute.xlu0 %1654
        %1656 = vset.pattern.permute.xlu0 0
        %1657 = vperm.xlu0 %1656, %v1408
        %v1658 = vpop.permute.xlu0 %1657
        %1659 = vset.pattern.permute.xlu0 0
        %1660 = vperm.xlu0 %1659, %v1409
        %v1661 = vpop.permute.xlu0 %1660
        %1662 = vset.pattern.permute.xlu0 0
        %1663 = vperm.xlu0 %1662, %v1410
        %v1664 = vpop.permute.xlu0 %1663
        %1665 = vset.pattern.permute.xlu0 0
        %1666 = vperm.xlu0 %1665, %v1411
        %v1667 = vpop.permute.xlu0 %1666
        %v1668 = vlaneseq
        %v1669 = vshrl.u32 %v1668, 7
        %v1670 = vsub.s32 %v626, %v1669
        %v1671 = vrot.slane %v1478, %v1670
        %v1672 = vlaneseq
        %v1673 = vshrl.u32 %v1672, 7
        %v1674 = vsub.s32 %v626, %v1673
        %v1675 = vrot.slane %v1481, %v1674
        %v1676 = vlaneseq
        %v1677 = vshrl.u32 %v1676, 7
        %v1678 = vsub.s32 %v626, %v1677
        %v1679 = vrot.slane %v1484, %v1678
        %v1680 = vlaneseq
        %v1681 = vshrl.u32 %v1680, 7
        %v1682 = vsub.s32 %v626, %v1681
        %v1683 = vrot.slane %v1487, %v1682
        %v1684 = vlaneseq
        %v1685 = vshrl.u32 %v1684, 7
        %v1686 = vsub.s32 %v626, %v1685
        %v1687 = vrot.slane %v1490, %v1686
        %v1688 = vlaneseq
        %v1689 = vshrl.u32 %v1688, 7
        %v1690 = vsub.s32 %v626, %v1689
        %v1691 = vrot.slane %v1493, %v1690
        %v1692 = vlaneseq
        %v1693 = vshrl.u32 %v1692, 7
        %v1694 = vsub.s32 %v626, %v1693
        %v1695 = vrot.slane %v1496, %v1694
        %v1696 = vlaneseq
        %v1697 = vshrl.u32 %v1696, 7
        %v1698 = vsub.s32 %v626, %v1697
        %v1699 = vrot.slane %v1499, %v1698
        %v1700 = vlaneseq
        %v1701 = vshrl.u32 %v1700, 7
        %v1702 = vsub.s32 %v626, %v1701
        %v1703 = vrot.slane %v1502, %v1702
        %v1704 = vlaneseq
        %v1705 = vshrl.u32 %v1704, 7
        %v1706 = vsub.s32 %v626, %v1705
        %v1707 = vrot.slane %v1505, %v1706
        %v1708 = vlaneseq
        %v1709 = vshrl.u32 %v1708, 7
        %v1710 = vsub.s32 %v626, %v1709
        %v1711 = vrot.slane %v1508, %v1710
        %v1712 = vlaneseq
        %v1713 = vshrl.u32 %v1712, 7
        %v1714 = vsub.s32 %v626, %v1713
        %v1715 = vrot.slane %v1511, %v1714
        %v1716 = vlaneseq
        %v1717 = vshrl.u32 %v1716, 7
        %v1718 = vsub.s32 %v626, %v1717
        %v1719 = vrot.slane %v1514, %v1718
        %v1720 = vlaneseq
        %v1721 = vshrl.u32 %v1720, 7
        %v1722 = vsub.s32 %v626, %v1721
        %v1723 = vrot.slane %v1517, %v1722
        %v1724 = vlaneseq
        %v1725 = vshrl.u32 %v1724, 7
        %v1726 = vsub.s32 %v626, %v1725
        %v1727 = vrot.slane %v1520, %v1726
        %v1728 = vlaneseq
        %v1729 = vshrl.u32 %v1728, 7
        %v1730 = vsub.s32 %v626, %v1729
        %v1731 = vrot.slane %v1523, %v1730
        %v1732 = vlaneseq
        %v1733 = vshrl.u32 %v1732, 7
        %v1734 = vsub.s32 %v626, %v1733
        %v1735 = vrot.slane %v1526, %v1734
        %v1736 = vlaneseq
        %v1737 = vshrl.u32 %v1736, 7
        %v1738 = vsub.s32 %v626, %v1737
        %v1739 = vrot.slane %v1529, %v1738
        %v1740 = vlaneseq
        %v1741 = vshrl.u32 %v1740, 7
        %v1742 = vsub.s32 %v626, %v1741
        %v1743 = vrot.slane %v1532, %v1742
        %v1744 = vlaneseq
        %v1745 = vshrl.u32 %v1744, 7
        %v1746 = vsub.s32 %v626, %v1745
        %v1747 = vrot.slane %v1535, %v1746
        %v1748 = vlaneseq
        %v1749 = vshrl.u32 %v1748, 7
        %v1750 = vsub.s32 %v626, %v1749
        %v1751 = vrot.slane %v1538, %v1750
        %v1752 = vlaneseq
        %v1753 = vshrl.u32 %v1752, 7
        %v1754 = vsub.s32 %v626, %v1753
        %v1755 = vrot.slane %v1541, %v1754
        %v1756 = vlaneseq
        %v1757 = vshrl.u32 %v1756, 7
        %v1758 = vsub.s32 %v626, %v1757
        %v1759 = vrot.slane %v1544, %v1758
        %v1760 = vlaneseq
        %v1761 = vshrl.u32 %v1760, 7
        %v1762 = vsub.s32 %v626, %v1761
        %v1763 = vrot.slane %v1547, %v1762
        %v1764 = vlaneseq
        %v1765 = vshrl.u32 %v1764, 7
        %v1766 = vsub.s32 %v626, %v1765
        %v1767 = vrot.slane %v1550, %v1766
        %v1768 = vlaneseq
        %v1769 = vshrl.u32 %v1768, 7
        %v1770 = vsub.s32 %v626, %v1769
        %v1771 = vrot.slane %v1553, %v1770
        %v1772 = vlaneseq
        %v1773 = vshrl.u32 %v1772, 7
        %v1774 = vsub.s32 %v626, %v1773
        %v1775 = vrot.slane %v1556, %v1774
        %v1776 = vlaneseq
        %v1777 = vshrl.u32 %v1776, 7
        %v1778 = vsub.s32 %v626, %v1777
        %v1779 = vrot.slane %v1559, %v1778
        %v1780 = vlaneseq
        %v1781 = vshrl.u32 %v1780, 7
        %v1782 = vsub.s32 %v626, %v1781
        %v1783 = vrot.slane %v1562, %v1782
        %v1784 = vlaneseq
        %v1785 = vshrl.u32 %v1784, 7
        %v1786 = vsub.s32 %v626, %v1785
        %v1787 = vrot.slane %v1565, %v1786
        %v1788 = vlaneseq
        %v1789 = vshrl.u32 %v1788, 7
        %v1790 = vsub.s32 %v626, %v1789
        %v1791 = vrot.slane %v1568, %v1790
        %v1792 = vlaneseq
        %v1793 = vshrl.u32 %v1792, 7
        %v1794 = vsub.s32 %v626, %v1793
        %v1795 = vrot.slane %v1571, %v1794
        %v1796 = vlaneseq
        %v1797 = vshrl.u32 %v1796, 7
        %v1798 = vsub.s32 %v626, %v1797
        %v1799 = vrot.slane %v1574, %v1798
        %v1800 = vlaneseq
        %v1801 = vshrl.u32 %v1800, 7
        %v1802 = vsub.s32 %v626, %v1801
        %v1803 = vrot.slane %v1577, %v1802
        %v1804 = vlaneseq
        %v1805 = vshrl.u32 %v1804, 7
        %v1806 = vsub.s32 %v626, %v1805
        %v1807 = vrot.slane %v1580, %v1806
        %v1808 = vlaneseq
        %v1809 = vshrl.u32 %v1808, 7
        %v1810 = vsub.s32 %v626, %v1809
        %v1811 = vrot.slane %v1583, %v1810
        %v1812 = vlaneseq
        %v1813 = vshrl.u32 %v1812, 7
        %v1814 = vsub.s32 %v626, %v1813
        %v1815 = vrot.slane %v1586, %v1814
        %v1816 = vlaneseq
        %v1817 = vshrl.u32 %v1816, 7
        %v1818 = vsub.s32 %v626, %v1817
        %v1819 = vrot.slane %v1589, %v1818
        %v1820 = vlaneseq
        %v1821 = vshrl.u32 %v1820, 7
        %v1822 = vsub.s32 %v626, %v1821
        %v1823 = vrot.slane %v1592, %v1822
        %v1824 = vlaneseq
        %v1825 = vshrl.u32 %v1824, 7
        %v1826 = vsub.s32 %v626, %v1825
        %v1827 = vrot.slane %v1595, %v1826
        %v1828 = vlaneseq
        %v1829 = vshrl.u32 %v1828, 7
        %v1830 = vsub.s32 %v626, %v1829
        %v1831 = vrot.slane %v1598, %v1830
        %v1832 = vlaneseq
        %v1833 = vshrl.u32 %v1832, 7
        %v1834 = vsub.s32 %v626, %v1833
        %v1835 = vrot.slane %v1601, %v1834
        %v1836 = vlaneseq
        %v1837 = vshrl.u32 %v1836, 7
        %v1838 = vsub.s32 %v626, %v1837
        %v1839 = vrot.slane %v1604, %v1838
        %v1840 = vlaneseq
        %v1841 = vshrl.u32 %v1840, 7
        %v1842 = vsub.s32 %v626, %v1841
        %v1843 = vrot.slane %v1607, %v1842
        %v1844 = vlaneseq
        %v1845 = vshrl.u32 %v1844, 7
        %v1846 = vsub.s32 %v626, %v1845
        %v1847 = vrot.slane %v1610, %v1846
        %v1848 = vlaneseq
        %v1849 = vshrl.u32 %v1848, 7
        %v1850 = vsub.s32 %v626, %v1849
        %v1851 = vrot.slane %v1613, %v1850
        %v1852 = vlaneseq
        %v1853 = vshrl.u32 %v1852, 7
        %v1854 = vsub.s32 %v626, %v1853
        %v1855 = vrot.slane %v1616, %v1854
        %v1856 = vlaneseq
        %v1857 = vshrl.u32 %v1856, 7
        %v1858 = vsub.s32 %v626, %v1857
        %v1859 = vrot.slane %v1619, %v1858
        %v1860 = vlaneseq
        %v1861 = vshrl.u32 %v1860, 7
        %v1862 = vsub.s32 %v626, %v1861
        %v1863 = vrot.slane %v1622, %v1862
        %v1864 = vlaneseq
        %v1865 = vshrl.u32 %v1864, 7
        %v1866 = vsub.s32 %v626, %v1865
        %v1867 = vrot.slane %v1625, %v1866
        %v1868 = vlaneseq
        %v1869 = vshrl.u32 %v1868, 7
        %v1870 = vsub.s32 %v626, %v1869
        %v1871 = vrot.slane %v1628, %v1870
        %v1872 = vlaneseq
        %v1873 = vshrl.u32 %v1872, 7
        %v1874 = vsub.s32 %v626, %v1873
        %v1875 = vrot.slane %v1631, %v1874
        %v1876 = vlaneseq
        %v1877 = vshrl.u32 %v1876, 7
        %v1878 = vsub.s32 %v626, %v1877
        %v1879 = vrot.slane %v1634, %v1878
        %v1880 = vlaneseq
        %v1881 = vshrl.u32 %v1880, 7
        %v1882 = vsub.s32 %v626, %v1881
        %v1883 = vrot.slane %v1637, %v1882
        %v1884 = vlaneseq
        %v1885 = vshrl.u32 %v1884, 7
        %v1886 = vsub.s32 %v626, %v1885
        %v1887 = vrot.slane %v1640, %v1886
        %v1888 = vlaneseq
        %v1889 = vshrl.u32 %v1888, 7
        %v1890 = vsub.s32 %v626, %v1889
        %v1891 = vrot.slane %v1643, %v1890
        %v1892 = vlaneseq
        %v1893 = vshrl.u32 %v1892, 7
        %v1894 = vsub.s32 %v626, %v1893
        %v1895 = vrot.slane %v1646, %v1894
        %v1896 = vlaneseq
        %v1897 = vshrl.u32 %v1896, 7
        %v1898 = vsub.s32 %v626, %v1897
        %v1899 = vrot.slane %v1649, %v1898
        %v1900 = vlaneseq
        %v1901 = vshrl.u32 %v1900, 7
        %v1902 = vsub.s32 %v626, %v1901
        %v1903 = vrot.slane %v1652, %v1902
        %v1904 = vlaneseq
        %v1905 = vshrl.u32 %v1904, 7
        %v1906 = vsub.s32 %v626, %v1905
        %v1907 = vrot.slane %v1655, %v1906
        %v1908 = vlaneseq
        %v1909 = vshrl.u32 %v1908, 7
        %v1910 = vsub.s32 %v626, %v1909
        %v1911 = vrot.slane %v1658, %v1910
        %v1912 = vlaneseq
        %v1913 = vshrl.u32 %v1912, 7
        %v1914 = vsub.s32 %v626, %v1913
        %v1915 = vrot.slane %v1661, %v1914
        %v1916 = vlaneseq
        %v1917 = vshrl.u32 %v1916, 7
        %v1918 = vsub.s32 %v626, %v1917
        %v1919 = vrot.slane %v1664, %v1918
        %v1920 = vlaneseq
        %v1921 = vshrl.u32 %v1920, 7
        %v1922 = vsub.s32 %v626, %v1921
        %v1923 = vrot.slane %v1667, %v1922
        %v1924 = vsel %vm797, %v1675, %v1671
        %v1925 = vsel %vm799, %v1679, %v1924
        %v1926 = vsel %vm801, %v1683, %v1925
        %vm1927 = vcmask 1044484
        %v1928 = vsel %vm1927, %v1687, %v1926
        %vm1929 = vcmask 1045509
        %v1930 = vsel %vm1929, %v1691, %v1928
        %vm1931 = vcmask 1046534
        %v1932 = vsel %vm1931, %v1695, %v1930
        %vm1933 = vcmask 1047559
        %v1934 = vsel %vm1933, %v1699, %v1932
        %v1935 = vsel %vm797, %v1707, %v1703
        %v1936 = vsel %vm799, %v1711, %v1935
        %v1937 = vsel %vm801, %v1715, %v1936
        %v1938 = vsel %vm1927, %v1719, %v1937
        %v1939 = vsel %vm1929, %v1723, %v1938
        %v1940 = vsel %vm1931, %v1727, %v1939
        %v1941 = vsel %vm1933, %v1731, %v1940
        %v1942 = vsel %vm797, %v1739, %v1735
        %v1943 = vsel %vm799, %v1743, %v1942
        %v1944 = vsel %vm801, %v1747, %v1943
        %v1945 = vsel %vm1927, %v1751, %v1944
        %v1946 = vsel %vm1929, %v1755, %v1945
        %v1947 = vsel %vm1931, %v1759, %v1946
        %v1948 = vsel %vm1933, %v1763, %v1947
        %v1949 = vsel %vm797, %v1771, %v1767
        %v1950 = vsel %vm799, %v1775, %v1949
        %v1951 = vsel %vm801, %v1779, %v1950
        %v1952 = vsel %vm1927, %v1783, %v1951
        %v1953 = vsel %vm1929, %v1787, %v1952
        %v1954 = vsel %vm1931, %v1791, %v1953
        %v1955 = vsel %vm1933, %v1795, %v1954
        %v1956 = vsel %vm797, %v1803, %v1799
        %v1957 = vsel %vm799, %v1807, %v1956
        %v1958 = vsel %vm801, %v1811, %v1957
        %v1959 = vsel %vm1927, %v1815, %v1958
        %v1960 = vsel %vm1929, %v1819, %v1959
        %v1961 = vsel %vm1931, %v1823, %v1960
        %v1962 = vsel %vm1933, %v1827, %v1961
        %v1963 = vsel %vm797, %v1835, %v1831
        %v1964 = vsel %vm799, %v1839, %v1963
        %v1965 = vsel %vm801, %v1843, %v1964
        %v1966 = vsel %vm1927, %v1847, %v1965
        %v1967 = vsel %vm1929, %v1851, %v1966
        %v1968 = vsel %vm1931, %v1855, %v1967
        %v1969 = vsel %vm1933, %v1859, %v1968
        %v1970 = vsel %vm797, %v1867, %v1863
        %v1971 = vsel %vm799, %v1871, %v1970
        %v1972 = vsel %vm801, %v1875, %v1971
        %v1973 = vsel %vm1927, %v1879, %v1972
        %v1974 = vsel %vm1929, %v1883, %v1973
        %v1975 = vsel %vm1931, %v1887, %v1974
        %v1976 = vsel %vm1933, %v1891, %v1975
        %v1977 = vsel %vm797, %v1899, %v1895
        %v1978 = vsel %vm799, %v1903, %v1977
        %v1979 = vsel %vm801, %v1907, %v1978
        %v1980 = vsel %vm1927, %v1911, %v1979
        %v1981 = vsel %vm1929, %v1915, %v1980
        %v1982 = vsel %vm1931, %v1919, %v1981
        %v1983 = vsel %vm1933, %v1923, %v1982
        %vm1992 = vcmask 31744
        %v1993 = vsel %vm1992, %v1934, 0.0
        %1994 = vadd.xlane.f32.xlu0 %v1993
        %v1995 = vpop.xlane.xlu0 %1994
        %v1996 = vsel %vm1992, %v1941, 0.0
        %1997 = vadd.xlane.f32.xlu0 %v1996
        %v1998 = vpop.xlane.xlu0 %1997
        %v1999 = vsel %vm1992, %v1948, 0.0
        %2000 = vadd.xlane.f32.xlu0 %v1999
        %v2001 = vpop.xlane.xlu0 %2000
        %v2002 = vsel %vm1992, %v1955, 0.0
        %2003 = vadd.xlane.f32.xlu0 %v2002
        %v2004 = vpop.xlane.xlu0 %2003
        %v2005 = vsel %vm1992, %v1962, 0.0
        %2006 = vadd.xlane.f32.xlu0 %v2005
        %v2007 = vpop.xlane.xlu0 %2006
        %v2008 = vsel %vm1992, %v1969, 0.0
        %2009 = vadd.xlane.f32.xlu0 %v2008
        %v2010 = vpop.xlane.xlu0 %2009
        %v2011 = vsel %vm1992, %v1976, 0.0
        %2012 = vadd.xlane.f32.xlu0 %v2011
        %v2013 = vpop.xlane.xlu0 %2012
        %v2014 = vsel %vm1992, %v1983, 0.0
        %2015 = vadd.xlane.f32.xlu0 %v2014
        %v2016 = vpop.xlane.xlu0 %2015
        %v2017 = vld [vmem:[%s4] sm:$0x1]
        %v2019 = vlaneseq
        %v2020 = vshrl.u32 %v2019, 7
        %v2021 = vsub.s32 0, %v2020
        %v2022 = vrot.slane %v2017, %v2021
        %2024 = vbcast.lane.b32.xlu0 %v2022, 256
        %v2025 = vpop.permute.xlu0 %2024
        %s2027 = sor.u32 256, 8
        %2028 = vbcast.lane.b32.xlu0 %v2022, %s2027
        %v2029 = vpop.permute.xlu0 %2028
        %s2031 = sor.u32 256, 16
        %2032 = vbcast.lane.b32.xlu0 %v2022, %s2031
        %v2033 = vpop.permute.xlu0 %2032
        %s2035 = sor.u32 256, 24
        %2036 = vbcast.lane.b32.xlu0 %v2022, %s2035
        %v2037 = vpop.permute.xlu0 %2036
        %s2039 = sor.u32 256, 32
        %2040 = vbcast.lane.b32.xlu0 %v2022, %s2039
        %v2041 = vpop.permute.xlu0 %2040
        %s2043 = sor.u32 256, 40
        %2044 = vbcast.lane.b32.xlu0 %v2022, %s2043
        %v2045 = vpop.permute.xlu0 %2044
        %s2047 = sor.u32 256, 48
        %2048 = vbcast.lane.b32.xlu0 %v2022, %s2047
        %v2049 = vpop.permute.xlu0 %2048
        %s2051 = sor.u32 256, 56
        %2052 = vbcast.lane.b32.xlu0 %v2022, %s2051
        %v2053 = vpop.permute.xlu0 %2052
        %v2062 = vadd.f32 %v1995, %v2025
        %v2063 = vadd.f32 %v1998, %v2029
        %v2064 = vadd.f32 %v2001, %v2033
        %v2065 = vadd.f32 %v2004, %v2037
        %v2066 = vadd.f32 %v2007, %v2041
        %v2067 = vadd.f32 %v2010, %v2045
        %v2068 = vadd.f32 %v2013, %v2049
        %v2069 = vadd.f32 %v2016, %v2053
        %v2070 = vsub.f32 0.0, %v2062
        %v2071 = vsub.f32 0.0, %v2063
        %v2072 = vsub.f32 0.0, %v2064
        %v2073 = vsub.f32 0.0, %v2065
        %v2074 = vsub.f32 0.0, %v2066
        %v2075 = vsub.f32 0.0, %v2067
        %v2076 = vsub.f32 0.0, %v2068
        %v2077 = vsub.f32 0.0, %v2069
        %v2078 = vmul.f32 %v2070, 1.442695
        %v2079 = vpow.pop %v2078
        %v2080 = vmul.f32 %v2071, 1.442695
        %v2081 = vpow.pop %v2080
        %v2082 = vmul.f32 %v2072, 1.442695
        %v2083 = vpow.pop %v2082
        %v2084 = vmul.f32 %v2073, 1.442695
        %v2085 = vpow.pop %v2084
        %v2086 = vmul.f32 %v2074, 1.442695
        %v2087 = vpow.pop %v2086
        %v2088 = vmul.f32 %v2075, 1.442695
        %v2089 = vpow.pop %v2088
        %v2090 = vmul.f32 %v2076, 1.442695
        %v2091 = vpow.pop %v2090
        %v2092 = vmul.f32 %v2077, 1.442695
        %v2093 = vpow.pop %v2092
        %v2094 = vadd.f32 %v2079, 1.0
        %v2095 = vadd.f32 %v2081, 1.0
        %v2096 = vadd.f32 %v2083, 1.0
        %v2097 = vadd.f32 %v2085, 1.0
        %v2098 = vadd.f32 %v2087, 1.0
        %v2099 = vadd.f32 %v2089, 1.0
        %v2100 = vadd.f32 %v2091, 1.0
        %v2101 = vadd.f32 %v2093, 1.0
        %v2102 = vrcp.pop %v2094
        %v2103 = vmul.f32 1.0, %v2102
        %v2104 = vrcp.pop %v2095
        %v2105 = vmul.f32 1.0, %v2104
        %v2106 = vrcp.pop %v2096
        %v2107 = vmul.f32 1.0, %v2106
        %v2108 = vrcp.pop %v2097
        %v2109 = vmul.f32 1.0, %v2108
        %v2110 = vrcp.pop %v2098
        %v2111 = vmul.f32 1.0, %v2110
        %v2112 = vrcp.pop %v2099
        %v2113 = vmul.f32 1.0, %v2112
        %v2114 = vrcp.pop %v2100
        %v2115 = vmul.f32 1.0, %v2114
        %v2116 = vrcp.pop %v2101
        %v2117 = vmul.f32 1.0, %v2116
        %2119 = vset.pattern.permute.xlu0 0
        %2120 = vperm.xlu0 %2119, %v2103
        %v2121 = vpop.permute.xlu0 %2120
        %2124 = vset.pattern.permute.xlu0 0
        %2125 = vperm.xlu0 %2124, %v2105
        %v2126 = vpop.permute.xlu0 %2125
        %2129 = vset.pattern.permute.xlu0 0
        %2130 = vperm.xlu0 %2129, %v2107
        %v2131 = vpop.permute.xlu0 %2130
        %2134 = vset.pattern.permute.xlu0 0
        %2135 = vperm.xlu0 %2134, %v2109
        %v2136 = vpop.permute.xlu0 %2135
        %2139 = vset.pattern.permute.xlu0 0
        %2140 = vperm.xlu0 %2139, %v2111
        %v2141 = vpop.permute.xlu0 %2140
        %2144 = vset.pattern.permute.xlu0 0
        %2145 = vperm.xlu0 %2144, %v2113
        %v2146 = vpop.permute.xlu0 %2145
        %2149 = vset.pattern.permute.xlu0 0
        %2150 = vperm.xlu0 %2149, %v2115
        %v2151 = vpop.permute.xlu0 %2150
        %2154 = vset.pattern.permute.xlu0 0
        %2155 = vperm.xlu0 %2154, %v2117
        %v2156 = vpop.permute.xlu0 %2155
        %v2158 = vmul.f32 %v243, %v2121
        %v2159 = vmul.f32 %v244, %v2121
        %v2160 = vmul.f32 %v245, %v2126
        %v2161 = vmul.f32 %v246, %v2126
        %v2162 = vmul.f32 %v247, %v2131
        %v2163 = vmul.f32 %v248, %v2131
        %v2164 = vmul.f32 %v249, %v2136
        %v2165 = vmul.f32 %v250, %v2136
        %v2166 = vmul.f32 %v251, %v2141
        %v2167 = vmul.f32 %v252, %v2141
        %v2168 = vmul.f32 %v253, %v2146
        %v2169 = vmul.f32 %v254, %v2146
        %v2170 = vmul.f32 %v255, %v2151
        %v2171 = vmul.f32 %v256, %v2151
        %v2172 = vmul.f32 %v257, %v2156
        %v2173 = vmul.f32 %v258, %v2156
        %2174 = vst [vmem:[%s242] sm:$0xff] %v2158
        %2175 = vst [vmem:[%s242 + $0x8] sm:$0xff] %v2159
        %2176 = vst [vmem:[%s242 + $0x10] sm:$0xff] %v2160
        %2177 = vst [vmem:[%s242 + $0x18] sm:$0xff] %v2161
        %2178 = vst [vmem:[%s242 + $0x20] sm:$0xff] %v2162
        %2179 = vst [vmem:[%s242 + $0x28] sm:$0xff] %v2163
        %2180 = vst [vmem:[%s242 + $0x30] sm:$0xff] %v2164
        %2181 = vst [vmem:[%s242 + $0x38] sm:$0xff] %v2165
        %2182 = vst [vmem:[%s242 + $0x40] sm:$0xff] %v2166
        %2183 = vst [vmem:[%s242 + $0x48] sm:$0xff] %v2167
        %2184 = vst [vmem:[%s242 + $0x50] sm:$0xff] %v2168
        %2185 = vst [vmem:[%s242 + $0x58] sm:$0xff] %v2169
        %2186 = vst [vmem:[%s242 + $0x60] sm:$0xff] %v2170
        %2187 = vst [vmem:[%s242 + $0x68] sm:$0xff] %v2171
        %2188 = vst [vmem:[%s242 + $0x70] sm:$0xff] %v2172
        %2189 = vst [vmem:[%s242 + $0x78] sm:$0xff] %v2173
        %s2190 = sand.u32 %s140, 1
        %s2191 = scalar_lea.sflag [#allocation4], %s2190
        %s2192 = sand.u32 %s140, 1
        %s2193 = smul.addr %s2192, 128
        %s2194 = scalar_lea.vmem [#allocation5], %s2193
        // Predicated region
        $region45: #{tpu_custom_call.1} parent=39 // pred_check
          %p2195 = pneg %p150
        $region46: #{tpu_custom_call.1} parent=39 // pred_check_branch
          %2197 = sbr.rel (%p2195) target = $region48
        $region47: #{tpu_custom_call.1} parent=39 // pred_region
          %s2199 = ssub.s32 2048, 2048
          %2200 = vsyncadd %s2191, %s2199
          %s2201 = smul.addr %s22, 16
          %s2202 = smul.addr %s2201, 128
          %s2203 = scalar_lea.hbm %s5, %s2202
          %s2204 = sshll.u32 %s2194, 4
          %s2205 = int_to_ptr.vmem [resolvable:$true] %s2204
          %2210 = dma.vmem_to_hbm [thread:$0]  %s2205, 2048, %s2203, %s2191, 256, 256, 16
        $region48: #{tpu_custom_call.1} parent=39 // pred_fallthru
          _
      $region40: #{tpu_custom_call.1} parent=5 // pred_fallthru
        _
      %p2211 = scmp.le.s32.totalorder 2, %s17
      // Predicated region
      $region49: #{tpu_custom_call.1} parent=5 // pred_check
        %p2212 = pneg %p2211
      $region50: #{tpu_custom_call.1} parent=5 // pred_check_branch
        %2214 = sbr.rel (%p2212) target = $region52
      $region51: #{tpu_custom_call.1} parent=5 // pred_region
        %s2215 = ssub.s32 %s17, 2
        // Predicated region
        $region53: #{tpu_custom_call.1} parent=51 // pred_check
          %p2216 = pneg %p156
        $region54: #{tpu_custom_call.1} parent=51 // pred_check_branch
          %2218 = sbr.rel (%p2216) target = $region56
        $region55: #{tpu_custom_call.1} parent=51 // pred_region
          %s2219 = sand.u32 %s141, 1
          %s2220 = scalar_lea.sflag [#allocation4], %s2219
          %s2221 = sand.u32 %s141, 1
          %s2222 = smul.addr %s2221, 128
          %s2223 = scalar_lea.vmem [#allocation5], %s2222
          %2224 = dma.done %s2220, 2048
        $region56: #{tpu_custom_call.1} parent=51 // pred_fallthru
          _
      $region52: #{tpu_custom_call.1} parent=5 // pred_fallthru
        _
    $region6: #{tpu_custom_call.1} parent=1 // loop_footer
      %s21 = sadd.s32 1, %s17
    $region7: #{tpu_custom_call.1} parent=1 // loop_footer_branch
      %16 = sbr.rel target = $region3
    $region8: #{tpu_custom_call.1} parent=1 // loop_exit
      _
    %2225 = vsyncpa [#allocation3], 1
    %s2226 = scalar_lea.sflag [#allocation3], 1
    %2227 = vsyncpa %s2226, 1
    %2228 = vsyncpa [#allocation4], 1
    %s2229 = scalar_lea.sflag [#allocation4], 1
    %2230 = vsyncpa %s2229, 1

</llo_original>
